<compile_context>
chip_gen: v7x
topology: tpu7x:2x2x1
jax: 0.10.0
libtpu: 0.0.40
codegen_flags: <defaults>
</compile_context>

<pallas_src>
import functools

import jax
import jax.numpy as jnp
from jax.experimental import pallas as pl
from jax.experimental.pallas import tpu as pltpu


def _bottleneck_kernel(x_ref, w1_ref, w2_ref, w3_ref, b1_ref, b2_ref, b3_ref,
                       o_ref, *, nb, h, w):
    hw = h * w
    m = nb * hw
    cin = x_ref.shape[-1]
    width = w1_ref.shape[-1]
    cout = w3_ref.shape[-1]

    # ---- conv1 (1x1, BN1 scale folded into w1) + bias + ReLU ---------------
    # x is re-read at the epilogue for the residual, so no f32 copy of the
    # input stays live across the two big matmuls (VMEM / vreg pressure).
    h1 = jnp.dot(x_ref[...].reshape(m, cin).astype(jnp.bfloat16), w1_ref[...],
                 preferred_element_type=jnp.float32)
    h1 = jnp.maximum(h1 + b1_ref[...], 0.0)                # (m, width) f32

    # ---- conv2 (3x3, stride 1, pad 1, BN2 scale folded) --------------------
    # Cast to bf16 BEFORE building the zero-padded buffer so the whole im2col
    # chain is half-width, then run 9 accumulated MXU dots over shifted slices
    # of the padded buffer -- the (m, 9*width) patches array is never built.
    h1b = h1.astype(jnp.bfloat16).reshape(nb, h, w, width)
    zrow = jnp.zeros((nb, 1, w, width), jnp.bfloat16)
    hp = jnp.concatenate([zrow, h1b, zrow], axis=1)        # (nb, h+2, w,   width)
    zcol = jnp.zeros((nb, h + 2, 1, width), jnp.bfloat16)
    hp = jnp.concatenate([zcol, hp, zcol], axis=2)         # (nb, h+2, w+2, width)
    # TODO(synk): a persistent pre-zeroed VMEM scratch would also drop the two
    # pad concats, but interior stores at sublane offset 1 on packed bf16 are
    # a lowering risk, so the (lowering-safe) concat pad is kept.
    h2 = None
    for t, (dy, dx) in enumerate(((dy, dx)
                                  for dy in range(3) for dx in range(3))):
        tap = hp[:, dy:dy + h, dx:dx + w, :].reshape(m, width)
        acc = jnp.dot(tap, w2_ref[t], preferred_element_type=jnp.float32)
        h2 = acc if h2 is None else h2 + acc
    h2 = jnp.maximum(h2 + b2_ref[...], 0.0)                # (m, width) f32

    # ---- conv3 (1x1, BN3 scale folded) + bias + residual + ReLU ------------
    h3 = jnp.dot(h2.astype(jnp.bfloat16), w3_ref[...],
                 preferred_element_type=jnp.float32)
    out = jnp.maximum(h3 + b3_ref[...] + x_ref[...].reshape(m, cout), 0.0)
    o_ref[...] = out.reshape(nb, h, w, cout)


def _fold_bn(stats, eps):
    gamma, beta, mean, var = stats
    scale = gamma / jnp.sqrt(var + eps)
    bias = (beta - mean * scale).reshape(1, -1).astype(jnp.float32)
    return scale, bias


def _vmem_limit_bytes():
    cap = 64 << 20
    try:
        cap = int(getattr(pltpu.get_tpu_info(), "vmem_capacity_bytes", cap))
    except Exception:
        pass
    # ~80% of physical, capped at 100 MiB: raises v5e/v6e past their scoped
    # defaults while keeping v7x inside its 64 MiB of physical VMEM.
    return min(int(cap * 0.8), 100 << 20)


def _choose_nb(n, h, w, cin, width, cout, vmem_limit):
    """Images packed per grid step, sized by a per-step VMEM byte budget."""
    hw = h * w
    per_img = (2 * hw * cin * 4                  # x block, double-buffered f32
               + 2 * hw * cout * 4               # out block, double-buffered f32
               + (h + 2) * (w + 2) * width * 2   # bf16 zero-padded conv2 input
               + hw * width * 12)                # h1 f32+bf16, h2 f32, tap bf16
    budget = int(vmem_limit * 0.6)               # headroom for compiler temps
    nb = max(1, min(n, budget // per_img))
    if n >= 2:
        # Keep >= 2 grid steps so the "parallel" axis can occupy both v7x TCs.
        nb = min(nb, (n + 1) // 2)
    return nb


def bottleneck_pallas_nhwc(x, params, eps=1e-5):
    """Fused BottleNeck forward on NHWC activations (transpose-free path)."""
    w1, w2, w3 = params["w1"], params["w2"], params["w3"]
    n, h, w, cin = x.shape
    width = w1.shape[0]
    cout = w3.shape[0]
    hw = h * w
    # stride=1, downsample=None path only: identity residual needs Cin == Cout.
    assert cin == cout, "identity residual requires inplanes == planes * expansion"

    s1, b1 = _fold_bn(params["bn1"], eps)
    s2, b2 = _fold_bn(params["bn2"], eps)
    s3, b3 = _fold_bn(params["bn3"], eps)

    # BN scales folded into conv weights; weights cast to bf16 for the MXU.
    w1_k = (jnp.transpose(w1[:, :, 0, 0]) * s1[None, :]).astype(jnp.bfloat16)
    w2_k = (jnp.transpose(w2, (2, 3, 1, 0)).reshape(9, width, width)
            * s2[None, None, :]).astype(jnp.bfloat16)       # (9, width, width)
    w3_k = (jnp.transpose(w3[:, :, 0, 0]) * s3[None, :]).astype(jnp.bfloat16)

    vmem_limit = _vmem_limit_bytes()
    nb = _choose_nb(n, h, w, cin, width, cout, vmem_limit)
    steps = -(-n // nb)
    n_pad = steps * nb
    if n_pad != n:
        # Pad the batch instead of letting awkward N collapse the block size.
        x = jnp.concatenate(
            [x, jnp.zeros((n_pad - n, h, w, cin), x.dtype)], axis=0)

    kernel = functools.partial(_bottleneck_kernel, nb=nb, h=h, w=w)

    def const_spec(shape):
        return pl.BlockSpec(shape, lambda i, _r=len(shape): (0,) * _r)

    flops = 2 * n_pad * hw * (cin * width + 9 * width * width + width * cout)
    bytes_accessed = (n_pad * hw * (cin + cout) * 4
                      + (w1_k.size + w2_k.size + w3_k.size) * 2
                      + (b1.size + b2.size + b3.size) * 4)
    cost = pl.CostEstimate(flops=int(flops), transcendentals=0,
                           bytes_accessed=int(bytes_accessed))

    out = pl.pallas_call(
        kernel,
        out_shape=jax.ShapeDtypeStruct((n_pad, h, w, cout), jnp.float32),
        grid_spec=pltpu.PrefetchScalarGridSpec(
            num_scalar_prefetch=0,
            grid=(steps,),
            in_specs=[
                pl.BlockSpec((nb, h, w, cin), lambda i: (i, 0, 0, 0)),
                const_spec(w1_k.shape), const_spec(w2_k.shape),
                const_spec(w3_k.shape),
                const_spec(b1.shape), const_spec(b2.shape), const_spec(b3.shape),
            ],
            out_specs=pl.BlockSpec((nb, h, w, cout), lambda i: (i, 0, 0, 0)),
        ),
        compiler_params=pltpu.CompilerParams(
            dimension_semantics=("parallel",),
            vmem_limit_bytes=vmem_limit),
        cost_estimate=cost,
    )(x, w1_k, w2_k, w3_k, b1, b2, b3)

    return out[:n] if n_pad != n else out


def bottleneck_pallas_nchw(x, params, eps=1e-5):
    """PyTorch-layout (NCHW) convenience wrapper around the NHWC kernel."""
    out = bottleneck_pallas_nhwc(jnp.transpose(x, (0, 2, 3, 1)), params, eps)
    return jnp.transpose(out, (0, 3, 1, 2))


# ----------------------- plain-JAX reference (NCHW) -------------------------
def ref_bottleneck(x, p, eps=1e-5):
    def bn(hh, stats):
        gamma, beta, mean, var = stats
        sh = (1, -1, 1, 1)
        return ((hh - mean.reshape(sh)) / jnp.sqrt(var.reshape(sh) + eps)
                * gamma.reshape(sh) + beta.reshape(sh))

    def conv(hh, wgt, pad):
        return jax.lax.conv_general_dilated(
            hh, wgt, (1, 1), [(pad, pad), (pad, pad)],
            dimension_numbers=("NCHW", "OIHW", "NCHW"),
            precision=jax.lax.Precision.HIGHEST)

    out = jax.nn.relu(bn(conv(x, p["w1"], 0), p["bn1"]))
    out = jax.nn.relu(bn(conv(out, p["w2"], 1), p["bn2"]))
    out = bn(conv(out, p["w3"], 0), p["bn3"])
    return jax.nn.relu(out + x)


if __name__ == "__main__":
    # BottleNeck(inplanes=16, planes=4): width = 4, expansion = 4 -> Cout = 16.
    # NOTE: these toy channel counts (<128 lanes) force masked stores; real
    # ResNet stages (C >= 256) are the lane-dense case the kernel targets.
    N, H, W = 4, 8, 8
    inplanes, planes = 16, 4
    width = planes            # base_width=64, groups=1
    cout = planes * 4         # expansion
    eps = 1e-5

    key = jax.random.PRNGKey(0)
    ks = jax.random.split(key, 8)

    x = jax.random.normal(ks[0], (N, inplanes, H, W), jnp.float32)

    # Conv weights (PyTorch OIHW layout), deterministic.
    w1 = 0.2 * jax.random.normal(ks[1], (width, inplanes, 1, 1), jnp.float32)
    w2 = 0.2 * jax.random.normal(ks[2], (width, width, 3, 3), jnp.float32)
    w3 = 0.2 * jax.random.normal(ks[3], (cout, width, 1, 1), jnp.float32)

    def bn_params(k, c):
        k1, k2, k3, k4 = jax.random.split(k, 4)
        gamma = jax.random.uniform(k1, (c,), jnp.float32, 0.75, 1.25)
        beta = 0.1 * jax.random.normal(k2, (c,), jnp.float32)
        mean = 0.1 * jax.random.normal(k3, (c,), jnp.float32)
        var = jax.random.uniform(k4, (c,), jnp.float32, 0.75, 1.25)
        return gamma, beta, mean, var

    params = {"w1": w1, "w2": w2, "w3": w3,
              "bn1": bn_params(ks[4], width),
              "bn2": bn_params(ks[5], width),
              "bn3": bn_params(ks[6], cout)}

    fwd = jax.jit(bottleneck_pallas_nchw)
    out = jax.block_until_ready(fwd(x, params))
    ref = jax.block_until_ready(ref_bottleneck(x, params, eps=eps))

    assert out.shape == ref.shape == (N, inplanes, H, W)
    max_err = float(jnp.max(jnp.abs(out - ref)))
    # bf16 MXU inputs (f32 accumulation + f32 epilogue) vs an f32 HIGHEST
    # precision reference -> loosened tolerance.
    assert jnp.allclose(out, ref, atol=5e-2, rtol=5e-2), max_err

    print("KERNEL_OK")
</pallas_src>

<mosaic_0001>
module attributes {stable_mosaic.version = 11 : i64} {
  func.func @_bottleneck_kernel(%arg0: i32, %arg1: memref<2x8x8x16xf32, #tpu.memory_space<vmem>>, %arg2: memref<16x4xbf16, #tpu.memory_space<vmem>>, %arg3: memref<9x4x4xbf16, #tpu.memory_space<vmem>>, %arg4: memref<4x16xbf16, #tpu.memory_space<vmem>>, %arg5: memref<1x4xf32, #tpu.memory_space<vmem>>, %arg6: memref<1x4xf32, #tpu.memory_space<vmem>>, %arg7: memref<1x16xf32, #tpu.memory_space<vmem>>, %arg8: memref<2x8x8x16xf32, #tpu.memory_space<vmem>>) attributes {dimension_semantics = [#tpu.dimension_semantics<parallel>], iteration_bounds = array<i64: 2>, scalar_prefetch = 0 : i64, scratch_operands = 0 : i64, tpu.core_type = #tpu.core_type<tc>, window_params = [{transform_indices = @transform_0, window_bounds = array<i64: 2, 8, 8, 16>}, {pipeline_mode = #tpu.pipeline_mode<synchronous>, transform_indices = @transform_1, window_bounds = array<i64: 16, 4>}, {pipeline_mode = #tpu.pipeline_mode<synchronous>, transform_indices = @transform_2, window_bounds = array<i64: 9, 4, 4>}, {pipeline_mode = #tpu.pipeline_mode<synchronous>, transform_indices = @transform_3, window_bounds = array<i64: 4, 16>}, {pipeline_mode = #tpu.pipeline_mode<synchronous>, transform_indices = @transform_4, window_bounds = array<i64: 1, 4>}, {pipeline_mode = #tpu.pipeline_mode<synchronous>, transform_indices = @transform_5, window_bounds = array<i64: 1, 4>}, {pipeline_mode = #tpu.pipeline_mode<synchronous>, transform_indices = @transform_6, window_bounds = array<i64: 1, 16>}, {transform_indices = @transform_7, window_bounds = array<i64: 2, 8, 8, 16>}]} {
    %c0 = arith.constant 0 : index
    %c0_0 = arith.constant 0 : index
    %c0_1 = arith.constant 0 : index
    %c0_2 = arith.constant 0 : index
    %0 = vector.load %arg1[%c0, %c0_0, %c0_1, %c0_2] : memref<2x8x8x16xf32, #tpu.memory_space<vmem>>, vector<2x8x8x16xf32>
    %1 = vector.shape_cast %0 : vector<2x8x8x16xf32> to vector<128x16xf32>
    %2 = arith.truncf %1 : vector<128x16xf32> to vector<128x16xbf16>
    %c0_3 = arith.constant 0 : index
    %c0_4 = arith.constant 0 : index
    %3 = vector.load %arg2[%c0_3, %c0_4] : memref<16x4xbf16, #tpu.memory_space<vmem>>, vector<16x4xbf16>
    %cst = arith.constant dense<0.000000e+00> : vector<128x4xf32>
    %4 = tpu.matmul %2, %3, %cst {dimension_numbers = #tpu.dot_dimension_numbers<[1], [0], [0], [1], [0, 0, 1, 1], [], []>} : vector<128x16xbf16>, vector<16x4xbf16>, vector<128x4xf32> -> vector<128x4xf32>
    %c0_5 = arith.constant 0 : index
    %c0_6 = arith.constant 0 : index
    %5 = vector.load %arg5[%c0_5, %c0_6] : memref<1x4xf32, #tpu.memory_space<vmem>>, vector<1x4xf32>
    %6 = vector.broadcast %5 : vector<1x4xf32> to vector<128x4xf32>
    %7 = arith.addf %4, %6 : vector<128x4xf32>
    %cst_7 = arith.constant 0.000000e+00 : f32
    %8 = vector.broadcast %cst_7 : f32 to vector<128x4xf32>
    %9 = arith.maximumf %7, %8 : vector<128x4xf32>
    %10 = arith.truncf %9 : vector<128x4xf32> to vector<128x4xbf16>
    %11 = vector.shape_cast %10 : vector<128x4xbf16> to vector<2x8x8x4xbf16>
    %cst_8 = arith.constant 0.000000e+00 : bf16
    %12 = vector.broadcast %cst_8 : bf16 to vector<2x1x8x4xbf16>
    %13 = tpu.concatenate %12, %11, %12 in 1 : vector<2x1x8x4xbf16>, vector<2x8x8x4xbf16>, vector<2x1x8x4xbf16> -> vector<2x10x8x4xbf16>
    %cst_9 = arith.constant 0.000000e+00 : bf16
    %14 = vector.broadcast %cst_9 : bf16 to vector<2x10x1x4xbf16>
    %15 = tpu.concatenate %14, %13, %14 in 2 : vector<2x10x1x4xbf16>, vector<2x10x8x4xbf16>, vector<2x10x1x4xbf16> -> vector<2x10x10x4xbf16>
    %16 = vector.extract_strided_slice %15 {offsets = [0, 0, 0, 0], sizes = [2, 8, 8, 4], strides = [1, 1, 1, 1]} : vector<2x10x10x4xbf16> to vector<2x8x8x4xbf16>
    %17 = vector.shape_cast %16 : vector<2x8x8x4xbf16> to vector<128x4xbf16>
    %c0_10 = arith.constant 0 : index
    %c0_11 = arith.constant 0 : index
    %c0_12 = arith.constant 0 : index
    %18 = vector.load %arg3[%c0_10, %c0_11, %c0_12] : memref<9x4x4xbf16, #tpu.memory_space<vmem>>, vector<1x4x4xbf16>
    %19 = vector.shape_cast %18 : vector<1x4x4xbf16> to vector<4x4xbf16>
    %cst_13 = arith.constant dense<0.000000e+00> : vector<128x4xf32>
    %20 = tpu.matmul %17, %19, %cst_13 {dimension_numbers = #tpu.dot_dimension_numbers<[1], [0], [0], [1], [0, 0, 1, 1], [], []>} : vector<128x4xbf16>, vector<4x4xbf16>, vector<128x4xf32> -> vector<128x4xf32>
    %21 = vector.extract_strided_slice %15 {offsets = [0, 0, 1, 0], sizes = [2, 8, 8, 4], strides = [1, 1, 1, 1]} : vector<2x10x10x4xbf16> to vector<2x8x8x4xbf16>
    %22 = vector.shape_cast %21 : vector<2x8x8x4xbf16> to vector<128x4xbf16>
    %c1 = arith.constant 1 : index
    %c0_14 = arith.constant 0 : index
    %c0_15 = arith.constant 0 : index
    %23 = vector.load %arg3[%c1, %c0_14, %c0_15] : memref<9x4x4xbf16, #tpu.memory_space<vmem>>, vector<1x4x4xbf16>
    %24 = vector.shape_cast %23 : vector<1x4x4xbf16> to vector<4x4xbf16>
    %cst_16 = arith.constant dense<0.000000e+00> : vector<128x4xf32>
    %25 = tpu.matmul %22, %24, %cst_16 {dimension_numbers = #tpu.dot_dimension_numbers<[1], [0], [0], [1], [0, 0, 1, 1], [], []>} : vector<128x4xbf16>, vector<4x4xbf16>, vector<128x4xf32> -> vector<128x4xf32>
    %26 = arith.addf %20, %25 : vector<128x4xf32>
    %27 = vector.extract_strided_slice %15 {offsets = [0, 0, 2, 0], sizes = [2, 8, 8, 4], strides = [1, 1, 1, 1]} : vector<2x10x10x4xbf16> to vector<2x8x8x4xbf16>
    %28 = vector.shape_cast %27 : vector<2x8x8x4xbf16> to vector<128x4xbf16>
    %c2 = arith.constant 2 : index
    %c0_17 = arith.constant 0 : index
    %c0_18 = arith.constant 0 : index
    %29 = vector.load %arg3[%c2, %c0_17, %c0_18] : memref<9x4x4xbf16, #tpu.memory_space<vmem>>, vector<1x4x4xbf16>
    %30 = vector.shape_cast %29 : vector<1x4x4xbf16> to vector<4x4xbf16>
    %cst_19 = arith.constant dense<0.000000e+00> : vector<128x4xf32>
    %31 = tpu.matmul %28, %30, %cst_19 {dimension_numbers = #tpu.dot_dimension_numbers<[1], [0], [0], [1], [0, 0, 1, 1], [], []>} : vector<128x4xbf16>, vector<4x4xbf16>, vector<128x4xf32> -> vector<128x4xf32>
    %32 = arith.addf %26, %31 : vector<128x4xf32>
    %33 = vector.extract_strided_slice %15 {offsets = [0, 1, 0, 0], sizes = [2, 8, 8, 4], strides = [1, 1, 1, 1]} : vector<2x10x10x4xbf16> to vector<2x8x8x4xbf16>
    %34 = vector.shape_cast %33 : vector<2x8x8x4xbf16> to vector<128x4xbf16>
    %c3 = arith.constant 3 : index
    %c0_20 = arith.constant 0 : index
    %c0_21 = arith.constant 0 : index
    %35 = vector.load %arg3[%c3, %c0_20, %c0_21] : memref<9x4x4xbf16, #tpu.memory_space<vmem>>, vector<1x4x4xbf16>
    %36 = vector.shape_cast %35 : vector<1x4x4xbf16> to vector<4x4xbf16>
    %cst_22 = arith.constant dense<0.000000e+00> : vector<128x4xf32>
    %37 = tpu.matmul %34, %36, %cst_22 {dimension_numbers = #tpu.dot_dimension_numbers<[1], [0], [0], [1], [0, 0, 1, 1], [], []>} : vector<128x4xbf16>, vector<4x4xbf16>, vector<128x4xf32> -> vector<128x4xf32>
    %38 = arith.addf %32, %37 : vector<128x4xf32>
    %39 = vector.extract_strided_slice %15 {offsets = [0, 1, 1, 0], sizes = [2, 8, 8, 4], strides = [1, 1, 1, 1]} : vector<2x10x10x4xbf16> to vector<2x8x8x4xbf16>
    %40 = vector.shape_cast %39 : vector<2x8x8x4xbf16> to vector<128x4xbf16>
    %c4 = arith.constant 4 : index
    %c0_23 = arith.constant 0 : index
    %c0_24 = arith.constant 0 : index
    %41 = vector.load %arg3[%c4, %c0_23, %c0_24] : memref<9x4x4xbf16, #tpu.memory_space<vmem>>, vector<1x4x4xbf16>
    %42 = vector.shape_cast %41 : vector<1x4x4xbf16> to vector<4x4xbf16>
    %cst_25 = arith.constant dense<0.000000e+00> : vector<128x4xf32>
    %43 = tpu.matmul %40, %42, %cst_25 {dimension_numbers = #tpu.dot_dimension_numbers<[1], [0], [0], [1], [0, 0, 1, 1], [], []>} : vector<128x4xbf16>, vector<4x4xbf16>, vector<128x4xf32> -> vector<128x4xf32>
    %44 = arith.addf %38, %43 : vector<128x4xf32>
    %45 = vector.extract_strided_slice %15 {offsets = [0, 1, 2, 0], sizes = [2, 8, 8, 4], strides = [1, 1, 1, 1]} : vector<2x10x10x4xbf16> to vector<2x8x8x4xbf16>
    %46 = vector.shape_cast %45 : vector<2x8x8x4xbf16> to vector<128x4xbf16>
    %c5 = arith.constant 5 : index
    %c0_26 = arith.constant 0 : index
    %c0_27 = arith.constant 0 : index
    %47 = vector.load %arg3[%c5, %c0_26, %c0_27] : memref<9x4x4xbf16, #tpu.memory_space<vmem>>, vector<1x4x4xbf16>
    %48 = vector.shape_cast %47 : vector<1x4x4xbf16> to vector<4x4xbf16>
    %cst_28 = arith.constant dense<0.000000e+00> : vector<128x4xf32>
    %49 = tpu.matmul %46, %48, %cst_28 {dimension_numbers = #tpu.dot_dimension_numbers<[1], [0], [0], [1], [0, 0, 1, 1], [], []>} : vector<128x4xbf16>, vector<4x4xbf16>, vector<128x4xf32> -> vector<128x4xf32>
    %50 = arith.addf %44, %49 : vector<128x4xf32>
    %51 = vector.extract_strided_slice %15 {offsets = [0, 2, 0, 0], sizes = [2, 8, 8, 4], strides = [1, 1, 1, 1]} : vector<2x10x10x4xbf16> to vector<2x8x8x4xbf16>
    %52 = vector.shape_cast %51 : vector<2x8x8x4xbf16> to vector<128x4xbf16>
    %c6 = arith.constant 6 : index
    %c0_29 = arith.constant 0 : index
    %c0_30 = arith.constant 0 : index
    %53 = vector.load %arg3[%c6, %c0_29, %c0_30] : memref<9x4x4xbf16, #tpu.memory_space<vmem>>, vector<1x4x4xbf16>
    %54 = vector.shape_cast %53 : vector<1x4x4xbf16> to vector<4x4xbf16>
    %cst_31 = arith.constant dense<0.000000e+00> : vector<128x4xf32>
    %55 = tpu.matmul %52, %54, %cst_31 {dimension_numbers = #tpu.dot_dimension_numbers<[1], [0], [0], [1], [0, 0, 1, 1], [], []>} : vector<128x4xbf16>, vector<4x4xbf16>, vector<128x4xf32> -> vector<128x4xf32>
    %56 = arith.addf %50, %55 : vector<128x4xf32>
    %57 = vector.extract_strided_slice %15 {offsets = [0, 2, 1, 0], sizes = [2, 8, 8, 4], strides = [1, 1, 1, 1]} : vector<2x10x10x4xbf16> to vector<2x8x8x4xbf16>
    %58 = vector.shape_cast %57 : vector<2x8x8x4xbf16> to vector<128x4xbf16>
    %c7 = arith.constant 7 : index
    %c0_32 = arith.constant 0 : index
    %c0_33 = arith.constant 0 : index
    %59 = vector.load %arg3[%c7, %c0_32, %c0_33] : memref<9x4x4xbf16, #tpu.memory_space<vmem>>, vector<1x4x4xbf16>
    %60 = vector.shape_cast %59 : vector<1x4x4xbf16> to vector<4x4xbf16>
    %cst_34 = arith.constant dense<0.000000e+00> : vector<128x4xf32>
    %61 = tpu.matmul %58, %60, %cst_34 {dimension_numbers = #tpu.dot_dimension_numbers<[1], [0], [0], [1], [0, 0, 1, 1], [], []>} : vector<128x4xbf16>, vector<4x4xbf16>, vector<128x4xf32> -> vector<128x4xf32>
    %62 = arith.addf %56, %61 : vector<128x4xf32>
    %63 = vector.extract_strided_slice %15 {offsets = [0, 2, 2, 0], sizes = [2, 8, 8, 4], strides = [1, 1, 1, 1]} : vector<2x10x10x4xbf16> to vector<2x8x8x4xbf16>
    %64 = vector.shape_cast %63 : vector<2x8x8x4xbf16> to vector<128x4xbf16>
    %c8 = arith.constant 8 : index
    %c0_35 = arith.constant 0 : index
    %c0_36 = arith.constant 0 : index
    %65 = vector.load %arg3[%c8, %c0_35, %c0_36] : memref<9x4x4xbf16, #tpu.memory_space<vmem>>, vector<1x4x4xbf16>
    %66 = vector.shape_cast %65 : vector<1x4x4xbf16> to vector<4x4xbf16>
    %cst_37 = arith.constant dense<0.000000e+00> : vector<128x4xf32>
    %67 = tpu.matmul %64, %66, %cst_37 {dimension_numbers = #tpu.dot_dimension_numbers<[1], [0], [0], [1], [0, 0, 1, 1], [], []>} : vector<128x4xbf16>, vector<4x4xbf16>, vector<128x4xf32> -> vector<128x4xf32>
    %68 = arith.addf %62, %67 : vector<128x4xf32>
    %c0_38 = arith.constant 0 : index
    %c0_39 = arith.constant 0 : index
    %69 = vector.load %arg6[%c0_38, %c0_39] : memref<1x4xf32, #tpu.memory_space<vmem>>, vector<1x4xf32>
    %70 = vector.broadcast %69 : vector<1x4xf32> to vector<128x4xf32>
    %71 = arith.addf %68, %70 : vector<128x4xf32>
    %cst_40 = arith.constant 0.000000e+00 : f32
    %72 = vector.broadcast %cst_40 : f32 to vector<128x4xf32>
    %73 = arith.maximumf %71, %72 : vector<128x4xf32>
    %74 = arith.truncf %73 : vector<128x4xf32> to vector<128x4xbf16>
    %c0_41 = arith.constant 0 : index
    %c0_42 = arith.constant 0 : index
    %75 = vector.load %arg4[%c0_41, %c0_42] : memref<4x16xbf16, #tpu.memory_space<vmem>>, vector<4x16xbf16>
    %cst_43 = arith.constant dense<0.000000e+00> : vector<128x16xf32>
    %76 = tpu.matmul %74, %75, %cst_43 {dimension_numbers = #tpu.dot_dimension_numbers<[1], [0], [0], [1], [0, 0, 1, 1], [], []>} : vector<128x4xbf16>, vector<4x16xbf16>, vector<128x16xf32> -> vector<128x16xf32>
    %c0_44 = arith.constant 0 : index
    %c0_45 = arith.constant 0 : index
    %77 = vector.load %arg7[%c0_44, %c0_45] : memref<1x16xf32, #tpu.memory_space<vmem>>, vector<1x16xf32>
    %78 = vector.broadcast %77 : vector<1x16xf32> to vector<128x16xf32>
    %79 = arith.addf %76, %78 : vector<128x16xf32>
    %c0_46 = arith.constant 0 : index
    %c0_47 = arith.constant 0 : index
    %c0_48 = arith.constant 0 : index
    %c0_49 = arith.constant 0 : index
    %80 = vector.load %arg1[%c0_46, %c0_47, %c0_48, %c0_49] : memref<2x8x8x16xf32, #tpu.memory_space<vmem>>, vector<2x8x8x16xf32>
    %81 = vector.shape_cast %80 : vector<2x8x8x16xf32> to vector<128x16xf32>
    %82 = arith.addf %79, %81 : vector<128x16xf32>
    %cst_50 = arith.constant 0.000000e+00 : f32
    %83 = vector.broadcast %cst_50 : f32 to vector<128x16xf32>
    %84 = arith.maximumf %82, %83 : vector<128x16xf32>
    %85 = vector.shape_cast %84 : vector<128x16xf32> to vector<2x8x8x16xf32>
    %c0_51 = arith.constant 0 : index
    %c0_52 = arith.constant 0 : index
    %c0_53 = arith.constant 0 : index
    %c0_54 = arith.constant 0 : index
    %86 = vector.load %arg8[%c0_51, %c0_52, %c0_53, %c0_54] : memref<2x8x8x16xf32, #tpu.memory_space<vmem>>, vector<2x8x8x16xf32>
    tpu.vector_store %arg8[%c0_51, %c0_52, %c0_53, %c0_54], %85 {strides = array<i32>} : memref<2x8x8x16xf32, #tpu.memory_space<vmem>>, vector<2x8x8x16xf32>,
    return
  }
  func.func @transform_0(%arg0: i32) -> (i32, i32, i32, i32) {
    %c0_i32 = arith.constant 0 : i32
    %c0_i32_0 = arith.constant 0 : i32
    %c0_i32_1 = arith.constant 0 : i32
    %c0_i32_2 = arith.constant 0 : i32
    return %arg0, %c0_i32, %c0_i32_0, %c0_i32_1 : i32, i32, i32, i32
  }
  func.func @transform_1(%arg0: i32) -> (i32, i32) {
    %c0_i32 = arith.constant 0 : i32
    %c0_i32_0 = arith.constant 0 : i32
    %c0_i32_1 = arith.constant 0 : i32
    return %c0_i32, %c0_i32_0 : i32, i32
  }
  func.func @transform_2(%arg0: i32) -> (i32, i32, i32) {
    %c0_i32 = arith.constant 0 : i32
    %c0_i32_0 = arith.constant 0 : i32
    %c0_i32_1 = arith.constant 0 : i32
    %c0_i32_2 = arith.constant 0 : i32
    return %c0_i32, %c0_i32_0, %c0_i32_1 : i32, i32, i32
  }
  func.func @transform_3(%arg0: i32) -> (i32, i32) {
    %c0_i32 = arith.constant 0 : i32
    %c0_i32_0 = arith.constant 0 : i32
    %c0_i32_1 = arith.constant 0 : i32
    return %c0_i32, %c0_i32_0 : i32, i32
  }
  func.func @transform_4(%arg0: i32) -> (i32, i32) {
    %c0_i32 = arith.constant 0 : i32
    %c0_i32_0 = arith.constant 0 : i32
    %c0_i32_1 = arith.constant 0 : i32
    return %c0_i32, %c0_i32_0 : i32, i32
  }
  func.func @transform_5(%arg0: i32) -> (i32, i32) {
    %c0_i32 = arith.constant 0 : i32
    %c0_i32_0 = arith.constant 0 : i32
    %c0_i32_1 = arith.constant 0 : i32
    return %c0_i32, %c0_i32_0 : i32, i32
  }
  func.func @transform_6(%arg0: i32) -> (i32, i32) {
    %c0_i32 = arith.constant 0 : i32
    %c0_i32_0 = arith.constant 0 : i32
    %c0_i32_1 = arith.constant 0 : i32
    return %c0_i32, %c0_i32_0 : i32, i32
  }
  func.func @transform_7(%arg0: i32) -> (i32, i32, i32, i32) {
    %c0_i32 = arith.constant 0 : i32
    %c0_i32_0 = arith.constant 0 : i32
    %c0_i32_1 = arith.constant 0 : i32
    %c0_i32_2 = arith.constant 0 : i32
    return %arg0, %c0_i32, %c0_i32_0, %c0_i32_1 : i32, i32, i32, i32
  }
}

</mosaic_0001>

<llo_original>
// kernel: bottleneck_pallas_nchw.1
$region0: #{bottleneck_pallas_nchw.1}
  #allocation0 [shape = 'u32[]', space=smem, size = 0x4, offset = 0x4, fixed_abs, tag = 'smem constant byte address 0x4 - core index']
  #allocation1 [shape = 'u32[144,128]{1,0:T(1,128)}', space=vmem, size = 0x12000, scoped, tag = 'internal scratch']
  %s0 = inlined_call_operand.hbm [shape: f32[4,8,8,16], index: 0, kind: input, shape index: {}]
  %s1 = inlined_call_operand.vmem [shape: bf16[16,4], index: 1, kind: input, shape index: {}]
  %s2 = inlined_call_operand.vmem [shape: bf16[9,4,4], index: 2, kind: input, shape index: {}]
  %s3 = inlined_call_operand.vmem [shape: bf16[4,16], index: 3, kind: input, shape index: {}]
  %s4 = inlined_call_operand.vmem [shape: f32[1,4], index: 4, kind: input, shape index: {}]
  %s5 = inlined_call_operand.vmem [shape: f32[1,4], index: 5, kind: input, shape index: {}]
  %s6 = inlined_call_operand.vmem [shape: f32[1,16], index: 6, kind: input, shape index: {}]
  %s7 = inlined_call_operand.hbm [shape: f32[4,8,8,16], index: 7, kind: output, shape index: {}]
  %s8 = sld [smem:[#allocation0]]
  $region65: #{bottleneck_pallas_nchw.1} parent=0
    _
  %s10 = ssub.s32 1, %s8
  %s11 = scalar_select 0, %s10, %s8
  $region1: #{bottleneck_pallas_nchw.1} parent=0
    #allocation2 [shape = 'u8[131072]{0}', space=vmem, size = 0x20000, scoped, tag = 'input window, operand 0']
    #allocation3 [shape = 's32[2]{0}', space=sflag, size = 0x8, scoped, tag = 'scoped memory for bottleneck_pallas_nchw.1']
    #allocation4 [shape = 's32[2]{0}', space=sflag, size = 0x8, scoped, tag = 'scoped memory for bottleneck_pallas_nchw.1']
    #allocation5 [shape = 'u8[131072]{0}', space=vmem, size = 0x20000, scoped, tag = 'output window, operand 0']
    %12 = vsyncpa [#allocation3], 0
    %s13 = scalar_lea.sflag [#allocation3], 1
    %14 = vsyncpa %s13, 0
    %15 = vsyncpa [#allocation4], 0
    %s16 = scalar_lea.sflag [#allocation4], 1
    %17 = vsyncpa %s16, 0
    loop: start=0, step=1, limit=4
    $region2: #{bottleneck_pallas_nchw.1} parent=1 // loop_pre_header
      _
    $region3: #{bottleneck_pallas_nchw.1} parent=1 // loop_header
      %s19 = sphi 0, %s23
      %p20 = scmp.ge.s32.totalorder %s19, 4
      %s29 = sphi 0, %s31
      %s32 = sphi 0, %s29
      %s33 = sphi 0, %s32
      %s49 = sphi 0, %s33
      %s53 = sphi 0, %s53
      %s55 = sphi 0, %s53
      %s56 = sphi 0, %s55
      %s70 = sphi 0, %s56
      %s74 = sphi 0, %s74
      %s76 = sphi 0, %s74
      %s77 = sphi 0, %s76
      %s91 = sphi 0, %s77
      %s95 = sphi 0, %s95
      %s97 = sphi 0, %s95
      %s98 = sphi 0, %s97
      %s112 = sphi 0, %s98
      %s116 = sphi 0, %s116
      %s118 = sphi 0, %s116
      %s119 = sphi 0, %s118
      %s133 = sphi 0, %s119
      %s137 = sphi 0, %s137
      %s139 = sphi 0, %s137
      %s140 = sphi 0, %s139
      %s154 = sphi 0, %s140
      %s158 = sphi 0, %s158
      %s160 = sphi 0, %s158
      %s161 = sphi 0, %s160
      %s175 = sphi 0, %s161
      %s181 = sphi 0, %s183
      %s184 = sphi 0, %s181
      %s185 = sphi 0, %s184
      %s201 = sphi 0, %s185
    $region4: #{bottleneck_pallas_nchw.1} parent=1 // loop_header_branch
      %22 = sbr.rel (%p20) target = $region8
    $region5: #{bottleneck_pallas_nchw.1} parent=1 // loop_body
      %s24 = ssub.s32 %s19, 1
      %s25 = ssub.s32 %s19, 2
      %s26 = sadd.s32 %s19, 1
      %s27 = ssub.s32 %s19, %s26
      %p28 = scmp.eq.s32.totalorder %s27, 0
      %s30 = sadd.s32 %s29, 1
      %s31 = scalar_select %p28, %s29, %s30
      %p34 = pneg %p28
      %p35 = scmp.eq.s32.totalorder %s19, 1
      %p36 = por %p34, %p35
      %p37 = scmp.ne.s32.totalorder %s29, %s32
      %p38 = scmp.eq.s32.totalorder %s19, 0
      %p39 = por %p37, %p38
      %p40 = scmp.ne.s32.totalorder %s29, %s32
      %p41 = scmp.eq.s32.totalorder %s24, 1
      %p42 = por %p40, %p41
      %p43 = scmp.ne.s32.totalorder %s32, %s33
      %p44 = scmp.eq.s32.totalorder %s24, 0
      %p45 = por %p43, %p44
      %p46 = scmp.ne.s32.totalorder %s32, %s33
      %p47 = scmp.eq.s32.totalorder %s25, 1
      %p48 = por %p46, %p47
      %p50 = scmp.ne.s32.totalorder %s33, %s49
      %p51 = scmp.eq.s32.totalorder %s25, 0
      %p52 = por %p50, %p51
      %s54 = sadd.s32 %s53, 1
      %p57 = scmp.eq.s32.totalorder %s19, 1
      %p58 = scmp.ne.s32.totalorder %s53, %s55
      %p59 = scmp.eq.s32.totalorder %s19, 0
      %p60 = por %p58, %p59
      %p61 = scmp.ne.s32.totalorder %s53, %s55
      %p62 = scmp.eq.s32.totalorder %s24, 1
      %p63 = por %p61, %p62
      %p64 = scmp.ne.s32.totalorder %s55, %s56
      %p65 = scmp.eq.s32.totalorder %s24, 0
      %p66 = por %p64, %p65
      %p67 = scmp.ne.s32.totalorder %s55, %s56
      %p68 = scmp.eq.s32.totalorder %s25, 1
      %p69 = por %p67, %p68
      %p71 = scmp.ne.s32.totalorder %s56, %s70
      %p72 = scmp.eq.s32.totalorder %s25, 0
      %p73 = por %p71, %p72
      %s75 = sadd.s32 %s74, 1
      %p78 = scmp.eq.s32.totalorder %s19, 1
      %p79 = scmp.ne.s32.totalorder %s74, %s76
      %p80 = scmp.eq.s32.totalorder %s19, 0
      %p81 = por %p79, %p80
      %p82 = scmp.ne.s32.totalorder %s74, %s76
      %p83 = scmp.eq.s32.totalorder %s24, 1
      %p84 = por %p82, %p83
      %p85 = scmp.ne.s32.totalorder %s76, %s77
      %p86 = scmp.eq.s32.totalorder %s24, 0
      %p87 = por %p85, %p86
      %p88 = scmp.ne.s32.totalorder %s76, %s77
      %p89 = scmp.eq.s32.totalorder %s25, 1
      %p90 = por %p88, %p89
      %p92 = scmp.ne.s32.totalorder %s77, %s91
      %p93 = scmp.eq.s32.totalorder %s25, 0
      %p94 = por %p92, %p93
      %s96 = sadd.s32 %s95, 1
      %p99 = scmp.eq.s32.totalorder %s19, 1
      %p100 = scmp.ne.s32.totalorder %s95, %s97
      %p101 = scmp.eq.s32.totalorder %s19, 0
      %p102 = por %p100, %p101
      %p103 = scmp.ne.s32.totalorder %s95, %s97
      %p104 = scmp.eq.s32.totalorder %s24, 1
      %p105 = por %p103, %p104
      %p106 = scmp.ne.s32.totalorder %s97, %s98
      %p107 = scmp.eq.s32.totalorder %s24, 0
      %p108 = por %p106, %p107
      %p109 = scmp.ne.s32.totalorder %s97, %s98
      %p110 = scmp.eq.s32.totalorder %s25, 1
      %p111 = por %p109, %p110
      %p113 = scmp.ne.s32.totalorder %s98, %s112
      %p114 = scmp.eq.s32.totalorder %s25, 0
      %p115 = por %p113, %p114
      %s117 = sadd.s32 %s116, 1
      %p120 = scmp.eq.s32.totalorder %s19, 1
      %p121 = scmp.ne.s32.totalorder %s116, %s118
      %p122 = scmp.eq.s32.totalorder %s19, 0
      %p123 = por %p121, %p122
      %p124 = scmp.ne.s32.totalorder %s116, %s118
      %p125 = scmp.eq.s32.totalorder %s24, 1
      %p126 = por %p124, %p125
      %p127 = scmp.ne.s32.totalorder %s118, %s119
      %p128 = scmp.eq.s32.totalorder %s24, 0
      %p129 = por %p127, %p128
      %p130 = scmp.ne.s32.totalorder %s118, %s119
      %p131 = scmp.eq.s32.totalorder %s25, 1
      %p132 = por %p130, %p131
      %p134 = scmp.ne.s32.totalorder %s119, %s133
      %p135 = scmp.eq.s32.totalorder %s25, 0
      %p136 = por %p134, %p135
      %s138 = sadd.s32 %s137, 1
      %p141 = scmp.eq.s32.totalorder %s19, 1
      %p142 = scmp.ne.s32.totalorder %s137, %s139
      %p143 = scmp.eq.s32.totalorder %s19, 0
      %p144 = por %p142, %p143
      %p145 = scmp.ne.s32.totalorder %s137, %s139
      %p146 = scmp.eq.s32.totalorder %s24, 1
      %p147 = por %p145, %p146
      %p148 = scmp.ne.s32.totalorder %s139, %s140
      %p149 = scmp.eq.s32.totalorder %s24, 0
      %p150 = por %p148, %p149
      %p151 = scmp.ne.s32.totalorder %s139, %s140
      %p152 = scmp.eq.s32.totalorder %s25, 1
      %p153 = por %p151, %p152
      %p155 = scmp.ne.s32.totalorder %s140, %s154
      %p156 = scmp.eq.s32.totalorder %s25, 0
      %p157 = por %p155, %p156
      %s159 = sadd.s32 %s158, 1
      %p162 = scmp.eq.s32.totalorder %s19, 1
      %p163 = scmp.ne.s32.totalorder %s158, %s160
      %p164 = scmp.eq.s32.totalorder %s19, 0
      %p165 = por %p163, %p164
      %p166 = scmp.ne.s32.totalorder %s158, %s160
      %p167 = scmp.eq.s32.totalorder %s24, 1
      %p168 = por %p166, %p167
      %p169 = scmp.ne.s32.totalorder %s160, %s161
      %p170 = scmp.eq.s32.totalorder %s24, 0
      %p171 = por %p169, %p170
      %p172 = scmp.ne.s32.totalorder %s160, %s161
      %p173 = scmp.eq.s32.totalorder %s25, 1
      %p174 = por %p172, %p173
      %p176 = scmp.ne.s32.totalorder %s161, %s175
      %p177 = scmp.eq.s32.totalorder %s25, 0
      %p178 = por %p176, %p177
      %s179 = ssub.s32 %s19, %s26
      %p180 = scmp.eq.s32.totalorder %s179, 0
      %s182 = sadd.s32 %s181, 1
      %s183 = scalar_select %p180, %s181, %s182
      %p186 = pneg %p180
      %p187 = scmp.eq.s32.totalorder %s19, 1
      %p188 = por %p186, %p187
      %p189 = scmp.ne.s32.totalorder %s181, %s184
      %p190 = scmp.eq.s32.totalorder %s19, 0
      %p191 = por %p189, %p190
      %p192 = scmp.ne.s32.totalorder %s181, %s184
      %p193 = scmp.eq.s32.totalorder %s24, 1
      %p194 = por %p192, %p193
      %p195 = scmp.ne.s32.totalorder %s184, %s185
      %p196 = scmp.eq.s32.totalorder %s24, 0
      %p197 = por %p195, %p196
      %p198 = scmp.ne.s32.totalorder %s184, %s185
      %p199 = scmp.eq.s32.totalorder %s25, 1
      %p200 = por %p198, %p199
      %p202 = scmp.ne.s32.totalorder %s185, %s201
      %p203 = scmp.eq.s32.totalorder %s25, 0
      %p204 = por %p202, %p203
      %p205 = scmp.le.s32.totalorder 1, %s19
      %p206 = scmp.lt.s32.totalorder %s19, 3
      %p207 = pnand %p205, %p206
      %p208 = pneg %p207
      // Predicated region
      $region9: #{bottleneck_pallas_nchw.1} parent=5 // pred_check
        _
      $region10: #{bottleneck_pallas_nchw.1} parent=5 // pred_check_branch
        %210 = sbr.rel (%p207) target = $region12
      $region11: #{bottleneck_pallas_nchw.1} parent=5 // pred_region
        %s211 = ssub.s32 %s19, 1
        // Predicated region
        $region13: #{bottleneck_pallas_nchw.1} parent=11 // pred_check
          %p212 = pneg %p66
        $region14: #{bottleneck_pallas_nchw.1} parent=11 // pred_check_branch
          %214 = sbr.rel (%p212) target = $region16
        $region15: #{bottleneck_pallas_nchw.1} parent=11 // pred_region
          _
        $region16: #{bottleneck_pallas_nchw.1} parent=11 // pred_fallthru
          _
        // Predicated region
        $region17: #{bottleneck_pallas_nchw.1} parent=11 // pred_check
          %p215 = pneg %p87
        $region18: #{bottleneck_pallas_nchw.1} parent=11 // pred_check_branch
          %217 = sbr.rel (%p215) target = $region20
        $region19: #{bottleneck_pallas_nchw.1} parent=11 // pred_region
          _
        $region20: #{bottleneck_pallas_nchw.1} parent=11 // pred_fallthru
          _
        // Predicated region
        $region21: #{bottleneck_pallas_nchw.1} parent=11 // pred_check
          %p218 = pneg %p108
        $region22: #{bottleneck_pallas_nchw.1} parent=11 // pred_check_branch
          %220 = sbr.rel (%p218) target = $region24
        $region23: #{bottleneck_pallas_nchw.1} parent=11 // pred_region
          _
        $region24: #{bottleneck_pallas_nchw.1} parent=11 // pred_fallthru
          _
        // Predicated region
        $region25: #{bottleneck_pallas_nchw.1} parent=11 // pred_check
          %p221 = pneg %p129
        $region26: #{bottleneck_pallas_nchw.1} parent=11 // pred_check_branch
          %223 = sbr.rel (%p221) target = $region28
        $region27: #{bottleneck_pallas_nchw.1} parent=11 // pred_region
          _
        $region28: #{bottleneck_pallas_nchw.1} parent=11 // pred_fallthru
          _
        // Predicated region
        $region29: #{bottleneck_pallas_nchw.1} parent=11 // pred_check
          %p224 = pneg %p150
        $region30: #{bottleneck_pallas_nchw.1} parent=11 // pred_check_branch
          %226 = sbr.rel (%p224) target = $region32
        $region31: #{bottleneck_pallas_nchw.1} parent=11 // pred_region
          _
        $region32: #{bottleneck_pallas_nchw.1} parent=11 // pred_fallthru
          _
        // Predicated region
        $region33: #{bottleneck_pallas_nchw.1} parent=11 // pred_check
          %p227 = pneg %p171
        $region34: #{bottleneck_pallas_nchw.1} parent=11 // pred_check_branch
          %229 = sbr.rel (%p227) target = $region36
        $region35: #{bottleneck_pallas_nchw.1} parent=11 // pred_region
          _
        $region36: #{bottleneck_pallas_nchw.1} parent=11 // pred_fallthru
          _
      $region12: #{bottleneck_pallas_nchw.1} parent=5 // pred_fallthru
        _
      %p230 = scmp.lt.s32.totalorder %s19, 2
      // Predicated region
      $region37: #{bottleneck_pallas_nchw.1} parent=5 // pred_check
        %p231 = pneg %p230
      $region38: #{bottleneck_pallas_nchw.1} parent=5 // pred_check_branch
        %233 = sbr.rel (%p231) target = $region40
      $region39: #{bottleneck_pallas_nchw.1} parent=5 // pred_region
        // Predicated region
        $region41: #{bottleneck_pallas_nchw.1} parent=39 // pred_check
          %p234 = pneg %p39
        $region42: #{bottleneck_pallas_nchw.1} parent=39 // pred_check_branch
          %236 = sbr.rel (%p234) target = $region44
        $region43: #{bottleneck_pallas_nchw.1} parent=39 // pred_region
          %s237 = sand.u32 %s29, 1
          %s238 = scalar_lea.sflag [#allocation3], %s237
          %s239 = sand.u32 %s29, 1
          %s240 = smul.addr %s239, 128
          %s241 = scalar_lea.vmem [#allocation2], %s240
          %s242 = smul.u32 2, %s19
          %s244 = ssub.s32 2048, 2048
          %245 = vsyncadd %s238, %s244
          %s246 = smul.addr %s242, 8
          %s247 = smul.addr %s246, 128
          %s248 = scalar_lea.hbm %s0, %s247
          %s249 = sshll.u32 %s241, 4
          %s250 = int_to_ptr.vmem [resolvable:$true] %s249
          %255 = dma.hbm_to_vmem [thread:$0]  %s248, 2048, %s250, %s238, 128, 128, 8
        $region44: #{bottleneck_pallas_nchw.1} parent=39 // pred_fallthru
          _
      $region40: #{bottleneck_pallas_nchw.1} parent=5 // pred_fallthru
        _
      %p256 = scmp.le.s32.totalorder 1, %s19
      %p257 = scmp.lt.s32.totalorder %s19, 3
      %p258 = pnand %p256, %p257
      %p259 = pneg %p258
      // Predicated region
      $region45: #{bottleneck_pallas_nchw.1} parent=5 // pred_check
        _
      $region46: #{bottleneck_pallas_nchw.1} parent=5 // pred_check_branch
        %261 = sbr.rel (%p258) target = $region48
      $region47: #{bottleneck_pallas_nchw.1} parent=5 // pred_region
        %s262 = ssub.s32 %s19, 1
        %s263 = sand.u32 %s32, 1
        %s264 = scalar_lea.sflag [#allocation3], %s263
        %s265 = sand.u32 %s32, 1
        %s266 = smul.addr %s265, 128
        %s267 = scalar_lea.vmem [#allocation2], %s266
        // Predicated region
        $region49: #{bottleneck_pallas_nchw.1} parent=47 // pred_check
          %p268 = pneg %p45
        $region50: #{bottleneck_pallas_nchw.1} parent=47 // pred_check_branch
          %270 = sbr.rel (%p268) target = $region52
        $region51: #{bottleneck_pallas_nchw.1} parent=47 // pred_region
          %271 = dma.done %s264, 2048
        $region52: #{bottleneck_pallas_nchw.1} parent=47 // pred_fallthru
          _
        %s272 = sand.u32 %s32, 1
        %s273 = scalar_lea.sflag [#allocation3], %s272
        %s274 = sand.u32 %s32, 1
        %s275 = smul.addr %s274, 128
        %s276 = scalar_lea.vmem [#allocation2], %s275
        %p277 = pneg %p45
        %p278 = pneg %p42
        %p279 = pneg %p66
        %p280 = pneg %p63
        %p281 = pneg %p87
        %p282 = pneg %p84
        %p283 = pneg %p108
        %p284 = pneg %p105
        %p285 = pneg %p129
        %p286 = pneg %p126
        %p287 = pneg %p150
        %p288 = pneg %p147
        %p289 = pneg %p171
        %p290 = pneg %p168
        %p291 = pneg %p197
        %p292 = pneg %p194
        %s293 = sand.u32 %s184, 1
        %s294 = scalar_lea.sflag [#allocation4], %s293
        %s295 = sand.u32 %s184, 1
        %s296 = smul.addr %s295, 128
        %s297 = scalar_lea.vmem [#allocation5], %s296
        %s298 = smul.u32 2, %s24
        %s299 = smul.u32 2, %s24
        %v301 = vld [vmem:[%s267] sm:$0xff]
        %v302 = vld [vmem:[%s267 + $0x8] sm:$0xff]
        %v303 = vld [vmem:[%s267 + $0x10] sm:$0xff]
        %v304 = vld [vmem:[%s267 + $0x18] sm:$0xff]
        %v305 = vld [vmem:[%s267 + $0x20] sm:$0xff]
        %v306 = vld [vmem:[%s267 + $0x28] sm:$0xff]
        %v307 = vld [vmem:[%s267 + $0x30] sm:$0xff]
        %v308 = vld [vmem:[%s267 + $0x38] sm:$0xff]
        %v309 = vld [vmem:[%s267 + $0x40] sm:$0xff]
        %v310 = vld [vmem:[%s267 + $0x48] sm:$0xff]
        %v311 = vld [vmem:[%s267 + $0x50] sm:$0xff]
        %v312 = vld [vmem:[%s267 + $0x58] sm:$0xff]
        %v313 = vld [vmem:[%s267 + $0x60] sm:$0xff]
        %v314 = vld [vmem:[%s267 + $0x68] sm:$0xff]
        %v315 = vld [vmem:[%s267 + $0x70] sm:$0xff]
        %v316 = vld [vmem:[%s267 + $0x78] sm:$0xff]
        %v317 = vpack.c.bf16 %v302, %v301
        %v318 = vpack.c.bf16 %v304, %v303
        %v319 = vpack.c.bf16 %v306, %v305
        %v320 = vpack.c.bf16 %v308, %v307
        %v321 = vpack.c.bf16 %v310, %v309
        %v322 = vpack.c.bf16 %v312, %v311
        %v323 = vpack.c.bf16 %v314, %v313
        %v324 = vpack.c.bf16 %v316, %v315
        %v325 = vld [vmem:[%s1] sm:$0xf]
        %v326 = vld [vmem:[%s1 + $0x4] sm:$0xf]
        %v327 = vld [vmem:[%s4] sm:$0x1]
        %v329 = vlaneseq
        %v330 = vshrl.u32 %v329, 7
        %v331 = vsub.s32 0, %v330
        %v332 = vrot.slane %v327, %v331
        %v336 = vunpack.c.l.b16 %v325
        %v337 = vunpack.c.l.b16 %v326
        %v338 = vpack.c.b16 %v337, %v336
        %vm340 = vcmask 130048
        %v342 = vsel %vm340, %v317, 0
        %v345 = vsel %vm340, %v318, 0
        %v348 = vsel %vm340, %v319, 0
        %v351 = vsel %vm340, %v320, 0
        %v354 = vsel %vm340, %v321, 0
        %v357 = vsel %vm340, %v322, 0
        %v360 = vsel %vm340, %v323, 0
        %v363 = vsel %vm340, %v324, 0
        %365 = vmatprep.subr.bf16.mxu0 0
        %366 = vmatpush1.bf16.msra.mxu0 %v338
        %367 = vmatprep.subr.bf16.mxu0 0
        %368 = vmatpush1.bf16.msra.mxu0 0
        %369 = vmatprep.subr.bf16.mxu0 0
        %370 = vmatpush1.bf16.msra.mxu0 0
        %371 = vmatprep.subr.bf16.mxu0 0
        %372 = vmatpush1.bf16.msra.mxu0 0
        %373 = vmatprep.subr.bf16.mxu0 0
        %374 = vmatpush1.bf16.msra.mxu0 0
        %375 = vmatprep.subr.bf16.mxu0 0
        %376 = vmatpush1.bf16.msra.mxu0 0
        %377 = vmatprep.subr.bf16.mxu0 0
        %378 = vmatpush1.bf16.msra.mxu0 0
        %379 = vmatprep.subr.bf16.mxu0 0
        %380 = vmatpush1.bf16.msra.mxu0 0
        %381 = vmatprep.subr.bf16.mxu0 0
        %382 = vmatpush1.bf16.msra.mxu0 0
        %383 = vmatprep.subr.bf16.mxu0 0
        %384 = vmatpush1.bf16.msra.mxu0 0
        %385 = vmatprep.subr.bf16.mxu0 0
        %386 = vmatpush1.bf16.msra.mxu0 0
        %387 = vmatprep.subr.bf16.mxu0 0
        %388 = vmatpush1.bf16.msra.mxu0 0
        %389 = vmatprep.subr.bf16.mxu0 0
        %390 = vmatpush1.bf16.msra.mxu0 0
        %391 = vmatprep.subr.bf16.mxu0 0
        %392 = vmatpush1.bf16.msra.mxu0 0
        %393 = vmatprep.subr.bf16.mxu0 0
        %394 = vmatpush1.bf16.msra.mxu0 0
        %395 = vmatprep.subr.bf16.mxu0 0
        %396 = vmatpush1.bf16.msra.mxu0 0
        %397 = vmatprep.mubr.bf16.mxu0 0
        %398 = vmatmul.mubr.bf16.gmra.mrb[0].mxu0 %v342
        %v399 = vpop.f32.mrb[0].mxu0
        %v400 = vadd.f32 %v332, %v399
        %v401 = vpop.f32.mrb[0].mxu0
        %v402 = vpop.f32.mrb[0].mxu0
        %v403 = vadd.f32 %v332, %v402
        %v404 = vpop.f32.mrb[0].mxu0
        %405 = vmatprep.mubr.bf16.mxu0 0
        %406 = vmatmul.mubr.bf16.gmra.mrb[0].mxu0 %v345
        %v407 = vpop.f32.mrb[0].mxu0
        %v408 = vadd.f32 %v332, %v407
        %v409 = vpop.f32.mrb[0].mxu0
        %v410 = vpop.f32.mrb[0].mxu0
        %v411 = vadd.f32 %v332, %v410
        %v412 = vpop.f32.mrb[0].mxu0
        %413 = vmatprep.mubr.bf16.mxu0 0
        %414 = vmatmul.mubr.bf16.gmra.mrb[0].mxu0 %v348
        %v415 = vpop.f32.mrb[0].mxu0
        %v416 = vadd.f32 %v332, %v415
        %v417 = vpop.f32.mrb[0].mxu0
        %v418 = vpop.f32.mrb[0].mxu0
        %v419 = vadd.f32 %v332, %v418
        %v420 = vpop.f32.mrb[0].mxu0
        %421 = vmatprep.mubr.bf16.mxu0 0
        %422 = vmatmul.mubr.bf16.gmra.mrb[0].mxu0 %v351
        %v423 = vpop.f32.mrb[0].mxu0
        %v424 = vadd.f32 %v332, %v423
        %v425 = vpop.f32.mrb[0].mxu0
        %v426 = vpop.f32.mrb[0].mxu0
        %v427 = vadd.f32 %v332, %v426
        %v428 = vpop.f32.mrb[0].mxu0
        %429 = vmatprep.mubr.bf16.mxu0 0
        %430 = vmatmul.mubr.bf16.gmra.mrb[0].mxu0 %v354
        %v431 = vpop.f32.mrb[0].mxu0
        %v432 = vadd.f32 %v332, %v431
        %v433 = vpop.f32.mrb[0].mxu0
        %v434 = vpop.f32.mrb[0].mxu0
        %v435 = vadd.f32 %v332, %v434
        %v436 = vpop.f32.mrb[0].mxu0
        %437 = vmatprep.mubr.bf16.mxu0 0
        %438 = vmatmul.mubr.bf16.gmra.mrb[0].mxu0 %v357
        %v439 = vpop.f32.mrb[0].mxu0
        %v440 = vadd.f32 %v332, %v439
        %v441 = vpop.f32.mrb[0].mxu0
        %v442 = vpop.f32.mrb[0].mxu0
        %v443 = vadd.f32 %v332, %v442
        %v444 = vpop.f32.mrb[0].mxu0
        %445 = vmatprep.mubr.bf16.mxu0 0
        %446 = vmatmul.mubr.bf16.gmra.mrb[0].mxu0 %v360
        %v447 = vpop.f32.mrb[0].mxu0
        %v448 = vadd.f32 %v332, %v447
        %v449 = vpop.f32.mrb[0].mxu0
        %v450 = vpop.f32.mrb[0].mxu0
        %v451 = vadd.f32 %v332, %v450
        %v452 = vpop.f32.mrb[0].mxu0
        %453 = vmatprep.mubr.bf16.mxu0 0
        %454 = vmatmul.mubr.bf16.gmra.mrb[0].mxu0 %v363
        %v455 = vpop.f32.mrb[0].mxu0
        %v456 = vadd.f32 %v332, %v455
        %v457 = vpop.f32.mrb[0].mxu0
        %v458 = vpop.f32.mrb[0].mxu0
        %v459 = vadd.f32 %v332, %v458
        %v460 = vpop.f32.mrb[0].mxu0
        %461 = vdwg.mxu0
        %v462 = vmax.f32 %v400, 0.0
        %v463 = vmax.f32 %v403, 0.0
        %v464 = vmax.f32 %v408, 0.0
        %v465 = vmax.f32 %v411, 0.0
        %v466 = vmax.f32 %v416, 0.0
        %v467 = vmax.f32 %v419, 0.0
        %v468 = vmax.f32 %v424, 0.0
        %v469 = vmax.f32 %v427, 0.0
        %v470 = vmax.f32 %v432, 0.0
        %v471 = vmax.f32 %v435, 0.0
        %v472 = vmax.f32 %v440, 0.0
        %v473 = vmax.f32 %v443, 0.0
        %v474 = vmax.f32 %v448, 0.0
        %v475 = vmax.f32 %v451, 0.0
        %v476 = vmax.f32 %v456, 0.0
        %v477 = vmax.f32 %v459, 0.0
        %v478 = vpack.c.bf16 %v463, %v462
        %v479 = vpack.c.bf16 %v465, %v464
        %v480 = vpack.c.bf16 %v467, %v466
        %v481 = vpack.c.bf16 %v469, %v468
        %v482 = vpack.c.bf16 %v471, %v470
        %v483 = vpack.c.bf16 %v473, %v472
        %v484 = vpack.c.bf16 %v475, %v474
        %v485 = vpack.c.bf16 %v477, %v476
        %v494 = vunpack.c.l.b16 %v478
        %v495 = vunpack.c.h.b16 %v478
        %v496 = vunpack.c.l.b16 %v479
        %v497 = vunpack.c.h.b16 %v479
        %v498 = vunpack.c.l.b16 %v480
        %v499 = vunpack.c.h.b16 %v480
        %v500 = vunpack.c.l.b16 %v481
        %v501 = vunpack.c.h.b16 %v481
        %v502 = vunpack.c.l.b16 %v482
        %v503 = vunpack.c.h.b16 %v482
        %v504 = vunpack.c.l.b16 %v483
        %v505 = vunpack.c.h.b16 %v483
        %v506 = vunpack.c.l.b16 %v484
        %v507 = vunpack.c.h.b16 %v484
        %v508 = vunpack.c.l.b16 %v485
        %v509 = vunpack.c.h.b16 %v485
        %v510 = vpack.c.b16 %v494, %v494
        %v511 = vpack.c.b16 %v495, %v495
        %v512 = vpack.c.b16 %v496, %v496
        %v513 = vpack.c.b16 %v497, %v497
        %v514 = vpack.c.b16 %v498, %v498
        %v515 = vpack.c.b16 %v499, %v499
        %v516 = vpack.c.b16 %v500, %v500
        %v517 = vpack.c.b16 %v501, %v501
        %v518 = vpack.c.b16 %v502, %v502
        %v519 = vpack.c.b16 %v503, %v503
        %v520 = vpack.c.b16 %v504, %v504
        %v521 = vpack.c.b16 %v505, %v505
        %v522 = vpack.c.b16 %v506, %v506
        %v523 = vpack.c.b16 %v507, %v507
        %v524 = vpack.c.b16 %v508, %v508
        %v525 = vpack.c.b16 %v509, %v509
        %v527 = vshrl.u32 0, 16
        %v529 = vrot.slane %v527, 7
        %v530 = vshll.u32 0, 16
        %v532 = vor.u32 %v529, %v530
        %v534 = vshrl.u32 %v510, 16
        %v536 = vrot.slane %v534, 7
        %v537 = vshll.u32 %v510, 16
        %v539 = vor.u32 %v536, %v537
        %v541 = vshrl.u32 %v511, 16
        %v543 = vrot.slane %v541, 7
        %v544 = vshll.u32 %v511, 16
        %v546 = vor.u32 %v543, %v544
        %v548 = vshrl.u32 %v512, 16
        %v550 = vrot.slane %v548, 7
        %v551 = vshll.u32 %v512, 16
        %v553 = vor.u32 %v550, %v551
        %v555 = vshrl.u32 %v513, 16
        %v557 = vrot.slane %v555, 7
        %v558 = vshll.u32 %v513, 16
        %v560 = vor.u32 %v557, %v558
        %v562 = vshrl.u32 %v514, 16
        %v564 = vrot.slane %v562, 7
        %v565 = vshll.u32 %v514, 16
        %v567 = vor.u32 %v564, %v565
        %v569 = vshrl.u32 %v515, 16
        %v571 = vrot.slane %v569, 7
        %v572 = vshll.u32 %v515, 16
        %v574 = vor.u32 %v571, %v572
        %v576 = vshrl.u32 %v516, 16
        %v578 = vrot.slane %v576, 7
        %v579 = vshll.u32 %v516, 16
        %v581 = vor.u32 %v578, %v579
        %v583 = vshrl.u32 %v517, 16
        %v585 = vrot.slane %v583, 7
        %v586 = vshll.u32 %v517, 16
        %v588 = vor.u32 %v585, %v586
        %v590 = vshrl.u32 %v518, 16
        %v592 = vrot.slane %v590, 7
        %v593 = vshll.u32 %v518, 16
        %v595 = vor.u32 %v592, %v593
        %v597 = vshrl.u32 %v519, 16
        %v599 = vrot.slane %v597, 7
        %v600 = vshll.u32 %v519, 16
        %v602 = vor.u32 %v599, %v600
        %v604 = vshrl.u32 %v520, 16
        %v606 = vrot.slane %v604, 7
        %v607 = vshll.u32 %v520, 16
        %v609 = vor.u32 %v606, %v607
        %v611 = vshrl.u32 %v521, 16
        %v613 = vrot.slane %v611, 7
        %v614 = vshll.u32 %v521, 16
        %v616 = vor.u32 %v613, %v614
        %v618 = vshrl.u32 %v522, 16
        %v620 = vrot.slane %v618, 7
        %v621 = vshll.u32 %v522, 16
        %v623 = vor.u32 %v620, %v621
        %v625 = vshrl.u32 %v523, 16
        %v627 = vrot.slane %v625, 7
        %v628 = vshll.u32 %v523, 16
        %v630 = vor.u32 %v627, %v628
        %v632 = vshrl.u32 %v524, 16
        %v634 = vrot.slane %v632, 7
        %v635 = vshll.u32 %v524, 16
        %v637 = vor.u32 %v634, %v635
        %v639 = vshrl.u32 %v525, 16
        %v641 = vrot.slane %v639, 7
        %v642 = vshll.u32 %v525, 16
        %v644 = vor.u32 %v641, %v642
        %vm662 = vcmask 1040384
        %vm663 = vsmask.f32 256
        %vm664 = vmand %vm662, %vm663
        %v665 = vsel %vm664, 0, %v532
        %v666 = vsel %vm664, 0, %v539
        %v667 = vsel %vm664, 0, %v546
        %v668 = vsel %vm664, 0, %v553
        %v669 = vsel %vm664, 0, %v560
        %v670 = vsel %vm664, 0, %v567
        %v671 = vsel %vm664, 0, %v574
        %v672 = vsel %vm664, 0, %v581
        %v673 = vsel %vm664, 0, %v588
        %v674 = vsel %vm664, 0, %v595
        %v675 = vsel %vm664, 0, %v602
        %v676 = vsel %vm664, 0, %v609
        %v677 = vsel %vm664, 0, %v616
        %v678 = vsel %vm664, 0, %v623
        %v679 = vsel %vm664, 0, %v630
        %v680 = vsel %vm664, 0, %v637
        %v681 = vsel %vm664, 0, %v644
        %vm682 = vcmask 1044480
        %vm683 = vsmask.f32 4352
        %vm684 = vmand %vm682, %vm683
        %v685 = vsel %vm684, %v665, 0
        %v686 = vsel %vm684, %v666, 0
        %v687 = vsel %vm684, %v667, 0
        %v688 = vsel %vm684, %v668, 0
        %v689 = vsel %vm684, %v669, 0
        %v690 = vsel %vm684, %v670, 0
        %v691 = vsel %vm684, %v671, 0
        %v692 = vsel %vm684, %v672, 0
        %v693 = vsel %vm684, %v673, 0
        %v694 = vsel %vm684, %v674, 0
        %v695 = vsel %vm684, %v675, 0
        %v696 = vsel %vm684, %v676, 0
        %v697 = vsel %vm684, %v677, 0
        %v698 = vsel %vm684, %v678, 0
        %v699 = vsel %vm684, %v679, 0
        %v700 = vsel %vm684, %v680, 0
        %v701 = vsel %vm684, %v681, 0
        %v702 = vld [vmem:[%s2] sm:$0x3]
        %v718 = vunpack.c.l.b16 %v685
        %v719 = vunpack.c.h.b16 %v685
        %v720 = vunpack.c.l.b16 %v686
        %v721 = vunpack.c.h.b16 %v686
        %v722 = vunpack.c.l.b16 %v687
        %v723 = vunpack.c.h.b16 %v687
        %v724 = vunpack.c.l.b16 %v688
        %v725 = vunpack.c.h.b16 %v688
        %v726 = vunpack.c.l.b16 %v689
        %v727 = vunpack.c.h.b16 %v689
        %v728 = vunpack.c.l.b16 %v690
        %v729 = vunpack.c.h.b16 %v690
        %v730 = vunpack.c.l.b16 %v691
        %v731 = vunpack.c.h.b16 %v691
        %v732 = vunpack.c.l.b16 %v692
        %v733 = vunpack.c.h.b16 %v692
        %v734 = vunpack.c.l.b16 %v694
        %v735 = vunpack.c.h.b16 %v694
        %v736 = vunpack.c.l.b16 %v695
        %v737 = vunpack.c.h.b16 %v695
        %v738 = vunpack.c.l.b16 %v696
        %v739 = vunpack.c.h.b16 %v696
        %v740 = vunpack.c.l.b16 %v697
        %v741 = vunpack.c.h.b16 %v697
        %v742 = vunpack.c.l.b16 %v698
        %v743 = vunpack.c.h.b16 %v698
        %v744 = vunpack.c.l.b16 %v699
        %v745 = vunpack.c.h.b16 %v699
        %v746 = vunpack.c.l.b16 %v700
        %v747 = vunpack.c.h.b16 %v700
        %v748 = vpack.c.b16 %v718, %v718
        %v749 = vpack.c.b16 %v719, %v719
        %v750 = vpack.c.b16 %v720, %v720
        %v751 = vpack.c.b16 %v721, %v721
        %v752 = vpack.c.b16 %v722, %v722
        %v753 = vpack.c.b16 %v723, %v723
        %v754 = vpack.c.b16 %v724, %v724
        %v755 = vpack.c.b16 %v725, %v725
        %v756 = vpack.c.b16 %v726, %v726
        %v757 = vpack.c.b16 %v727, %v727
        %v758 = vpack.c.b16 %v728, %v728
        %v759 = vpack.c.b16 %v729, %v729
        %v760 = vpack.c.b16 %v730, %v730
        %v761 = vpack.c.b16 %v731, %v731
        %v762 = vpack.c.b16 %v732, %v732
        %v763 = vpack.c.b16 %v733, %v733
        %v764 = vpack.c.b16 %v734, %v734
        %v765 = vpack.c.b16 %v735, %v735
        %v766 = vpack.c.b16 %v736, %v736
        %v767 = vpack.c.b16 %v737, %v737
        %v768 = vpack.c.b16 %v738, %v738
        %v769 = vpack.c.b16 %v739, %v739
        %v770 = vpack.c.b16 %v740, %v740
        %v771 = vpack.c.b16 %v741, %v741
        %v772 = vpack.c.b16 %v742, %v742
        %v773 = vpack.c.b16 %v743, %v743
        %v774 = vpack.c.b16 %v744, %v744
        %v775 = vpack.c.b16 %v745, %v745
        %v776 = vpack.c.b16 %v746, %v746
        %v777 = vpack.c.b16 %v747, %v747
        %vm778 = vsmask.f32 3328
        %vm779 = vsmask.f32 7440
        %vm780 = vmor %vm778, %vm779
        %v782 = vshrl.u32 %v748, 16
        %v784 = vrot.slane %v782, 4
        %v785 = vshll.u32 %v748, 16
        %v787 = vrot.slane %v785, 5
        %v788 = vor.u32 %v784, %v787
        %v789 = vrot.slane %v788, 4
        %v791 = vshll.u32 %v749, 16
        %v793 = vrot.slane %v791, 5
        %v794 = vsel %vm780, %v789, %v793
        %v796 = vshrl.u32 %v750, 16
        %v798 = vrot.slane %v796, 4
        %v799 = vshll.u32 %v750, 16
        %v801 = vrot.slane %v799, 5
        %v802 = vor.u32 %v798, %v801
        %v803 = vrot.slane %v802, 4
        %v805 = vshll.u32 %v751, 16
        %v807 = vrot.slane %v805, 5
        %v808 = vsel %vm780, %v803, %v807
        %v810 = vshrl.u32 %v752, 16
        %v812 = vrot.slane %v810, 4
        %v813 = vshll.u32 %v752, 16
        %v815 = vrot.slane %v813, 5
        %v816 = vor.u32 %v812, %v815
        %v817 = vrot.slane %v816, 4
        %v819 = vshll.u32 %v753, 16
        %v821 = vrot.slane %v819, 5
        %v822 = vsel %vm780, %v817, %v821
        %v824 = vshrl.u32 %v754, 16
        %v826 = vrot.slane %v824, 4
        %v827 = vshll.u32 %v754, 16
        %v829 = vrot.slane %v827, 5
        %v830 = vor.u32 %v826, %v829
        %v831 = vrot.slane %v830, 4
        %v833 = vshll.u32 %v755, 16
        %v835 = vrot.slane %v833, 5
        %v836 = vsel %vm780, %v831, %v835
        %v838 = vshrl.u32 %v756, 16
        %v840 = vrot.slane %v838, 4
        %v841 = vshll.u32 %v756, 16
        %v843 = vrot.slane %v841, 5
        %v844 = vor.u32 %v840, %v843
        %v845 = vrot.slane %v844, 4
        %v847 = vshll.u32 %v757, 16
        %v849 = vrot.slane %v847, 5
        %v850 = vsel %vm780, %v845, %v849
        %v852 = vshrl.u32 %v758, 16
        %v854 = vrot.slane %v852, 4
        %v855 = vshll.u32 %v758, 16
        %v857 = vrot.slane %v855, 5
        %v858 = vor.u32 %v854, %v857
        %v859 = vrot.slane %v858, 4
        %v861 = vshll.u32 %v759, 16
        %v863 = vrot.slane %v861, 5
        %v864 = vsel %vm780, %v859, %v863
        %v866 = vshrl.u32 %v760, 16
        %v868 = vrot.slane %v866, 4
        %v869 = vshll.u32 %v760, 16
        %v871 = vrot.slane %v869, 5
        %v872 = vor.u32 %v868, %v871
        %v873 = vrot.slane %v872, 4
        %v875 = vshll.u32 %v761, 16
        %v877 = vrot.slane %v875, 5
        %v878 = vsel %vm780, %v873, %v877
        %v880 = vshrl.u32 %v762, 16
        %v882 = vrot.slane %v880, 4
        %v883 = vshll.u32 %v762, 16
        %v885 = vrot.slane %v883, 5
        %v886 = vor.u32 %v882, %v885
        %v887 = vrot.slane %v886, 4
        %v889 = vshll.u32 %v763, 16
        %v891 = vrot.slane %v889, 5
        %v892 = vsel %vm780, %v887, %v891
        %v894 = vshrl.u32 %v764, 16
        %v896 = vrot.slane %v894, 4
        %v897 = vshll.u32 %v764, 16
        %v899 = vrot.slane %v897, 5
        %v900 = vor.u32 %v896, %v899
        %v901 = vrot.slane %v900, 4
        %v903 = vshll.u32 %v765, 16
        %v905 = vrot.slane %v903, 5
        %v906 = vsel %vm780, %v901, %v905
        %v908 = vshrl.u32 %v766, 16
        %v910 = vrot.slane %v908, 4
        %v911 = vshll.u32 %v766, 16
        %v913 = vrot.slane %v911, 5
        %v914 = vor.u32 %v910, %v913
        %v915 = vrot.slane %v914, 4
        %v917 = vshll.u32 %v767, 16
        %v919 = vrot.slane %v917, 5
        %v920 = vsel %vm780, %v915, %v919
        %v922 = vshrl.u32 %v768, 16
        %v924 = vrot.slane %v922, 4
        %v925 = vshll.u32 %v768, 16
        %v927 = vrot.slane %v925, 5
        %v928 = vor.u32 %v924, %v927
        %v929 = vrot.slane %v928, 4
        %v931 = vshll.u32 %v769, 16
        %v933 = vrot.slane %v931, 5
        %v934 = vsel %vm780, %v929, %v933
        %v936 = vshrl.u32 %v770, 16
        %v938 = vrot.slane %v936, 4
        %v939 = vshll.u32 %v770, 16
        %v941 = vrot.slane %v939, 5
        %v942 = vor.u32 %v938, %v941
        %v943 = vrot.slane %v942, 4
        %v945 = vshll.u32 %v771, 16
        %v947 = vrot.slane %v945, 5
        %v948 = vsel %vm780, %v943, %v947
        %v950 = vshrl.u32 %v772, 16
        %v952 = vrot.slane %v950, 4
        %v953 = vshll.u32 %v772, 16
        %v955 = vrot.slane %v953, 5
        %v956 = vor.u32 %v952, %v955
        %v957 = vrot.slane %v956, 4
        %v959 = vshll.u32 %v773, 16
        %v961 = vrot.slane %v959, 5
        %v962 = vsel %vm780, %v957, %v961
        %v964 = vshrl.u32 %v774, 16
        %v966 = vrot.slane %v964, 4
        %v967 = vshll.u32 %v774, 16
        %v969 = vrot.slane %v967, 5
        %v970 = vor.u32 %v966, %v969
        %v971 = vrot.slane %v970, 4
        %v973 = vshll.u32 %v775, 16
        %v975 = vrot.slane %v973, 5
        %v976 = vsel %vm780, %v971, %v975
        %v978 = vshrl.u32 %v776, 16
        %v980 = vrot.slane %v978, 4
        %v981 = vshll.u32 %v776, 16
        %v983 = vrot.slane %v981, 5
        %v984 = vor.u32 %v980, %v983
        %v985 = vrot.slane %v984, 4
        %v987 = vshll.u32 %v777, 16
        %v989 = vrot.slane %v987, 5
        %v990 = vsel %vm780, %v985, %v989
        %s991 = scalar_lea.vmem %s2, 2
        %v992 = vld [vmem:[%s991] sm:$0x3]
        %v993 = vunpack.c.l.b16 %v794
        %v994 = vunpack.c.l.b16 %v808
        %v995 = vunpack.c.l.b16 %v822
        %v996 = vunpack.c.l.b16 %v836
        %v997 = vunpack.c.l.b16 %v850
        %v998 = vunpack.c.l.b16 %v864
        %v999 = vunpack.c.l.b16 %v878
        %v1000 = vunpack.c.l.b16 %v892
        %v1001 = vunpack.c.l.b16 %v906
        %v1002 = vunpack.c.l.b16 %v920
        %v1003 = vunpack.c.l.b16 %v934
        %v1004 = vunpack.c.l.b16 %v948
        %v1005 = vunpack.c.l.b16 %v962
        %v1006 = vunpack.c.l.b16 %v976
        %v1007 = vunpack.c.l.b16 %v990
        %v1008 = vpack.c.b16 %v994, %v993
        %v1009 = vpack.c.b16 %v996, %v995
        %v1010 = vpack.c.b16 %v998, %v997
        %v1011 = vpack.c.b16 %v1000, %v999
        %v1012 = vpack.c.b16 %v1001, %v993
        %v1013 = vpack.c.b16 %v1003, %v1002
        %v1014 = vpack.c.b16 %v1005, %v1004
        %v1015 = vpack.c.b16 %v1007, %v1006
        %vm1016 = vcmask 31744
        %v1018 = vsel %vm1016, %v1008, 0
        %v1021 = vsel %vm1016, %v1009, 0
        %v1024 = vsel %vm1016, %v1010, 0
        %v1027 = vsel %vm1016, %v1011, 0
        %v1030 = vsel %vm1016, %v1012, 0
        %v1033 = vsel %vm1016, %v1013, 0
        %v1036 = vsel %vm1016, %v1014, 0
        %v1039 = vsel %vm1016, %v1015, 0
        %vm1041 = vcmask 1041408
        %v1043 = vsel %vm1041, %v992, 0
        %1045 = vmatprep.subr.bf16.mxu0 0
        %1046 = vmatpush1.bf16.msra.mxu0 %v1043
        %1047 = vmatprep.subr.bf16.mxu0 0
        %1048 = vmatpush1.bf16.msra.mxu0 0
        %1049 = vmatprep.subr.bf16.mxu0 0
        %1050 = vmatpush1.bf16.msra.mxu0 0
        %1051 = vmatprep.subr.bf16.mxu0 0
        %1052 = vmatpush1.bf16.msra.mxu0 0
        %1053 = vmatprep.subr.bf16.mxu0 0
        %1054 = vmatpush1.bf16.msra.mxu0 0
        %1055 = vmatprep.subr.bf16.mxu0 0
        %1056 = vmatpush1.bf16.msra.mxu0 0
        %1057 = vmatprep.subr.bf16.mxu0 0
        %1058 = vmatpush1.bf16.msra.mxu0 0
        %1059 = vmatprep.subr.bf16.mxu0 0
        %1060 = vmatpush1.bf16.msra.mxu0 0
        %1061 = vmatprep.subr.bf16.mxu0 0
        %1062 = vmatpush1.bf16.msra.mxu0 0
        %1063 = vmatprep.subr.bf16.mxu0 0
        %1064 = vmatpush1.bf16.msra.mxu0 0
        %1065 = vmatprep.subr.bf16.mxu0 0
        %1066 = vmatpush1.bf16.msra.mxu0 0
        %1067 = vmatprep.subr.bf16.mxu0 0
        %1068 = vmatpush1.bf16.msra.mxu0 0
        %1069 = vmatprep.subr.bf16.mxu0 0
        %1070 = vmatpush1.bf16.msra.mxu0 0
        %1071 = vmatprep.subr.bf16.mxu0 0
        %1072 = vmatpush1.bf16.msra.mxu0 0
        %1073 = vmatprep.subr.bf16.mxu0 0
        %1074 = vmatpush1.bf16.msra.mxu0 0
        %1075 = vmatprep.subr.bf16.mxu0 0
        %1076 = vmatpush1.bf16.msra.mxu0 0
        %1077 = vmatprep.mubr.bf16.mxu0 0
        %1078 = vmatmul.mubr.bf16.gmra.mrb[0].mxu0 %v1018
        %v1079 = vpop.f32.mrb[0].mxu0
        %v1080 = vadd.f32 0.0, %v1079
        %v1081 = vpop.f32.mrb[0].mxu0
        %v1082 = vpop.f32.mrb[0].mxu0
        %v1083 = vadd.f32 0.0, %v1082
        %v1084 = vpop.f32.mrb[0].mxu0
        %1085 = vmatprep.mubr.bf16.mxu0 0
        %1086 = vmatmul.mubr.bf16.gmra.mrb[0].mxu0 %v1021
        %v1087 = vpop.f32.mrb[0].mxu0
        %v1088 = vadd.f32 0.0, %v1087
        %v1089 = vpop.f32.mrb[0].mxu0
        %v1090 = vpop.f32.mrb[0].mxu0
        %v1091 = vadd.f32 0.0, %v1090
        %v1092 = vpop.f32.mrb[0].mxu0
        %1093 = vmatprep.mubr.bf16.mxu0 0
        %1094 = vmatmul.mubr.bf16.gmra.mrb[0].mxu0 %v1024
        %v1095 = vpop.f32.mrb[0].mxu0
        %v1096 = vadd.f32 0.0, %v1095
        %v1097 = vpop.f32.mrb[0].mxu0
        %v1098 = vpop.f32.mrb[0].mxu0
        %v1099 = vadd.f32 0.0, %v1098
        %v1100 = vpop.f32.mrb[0].mxu0
        %1101 = vmatprep.mubr.bf16.mxu0 0
        %1102 = vmatmul.mubr.bf16.gmra.mrb[0].mxu0 %v1027
        %v1103 = vpop.f32.mrb[0].mxu0
        %v1104 = vadd.f32 0.0, %v1103
        %v1105 = vpop.f32.mrb[0].mxu0
        %v1106 = vpop.f32.mrb[0].mxu0
        %v1107 = vadd.f32 0.0, %v1106
        %v1108 = vpop.f32.mrb[0].mxu0
        %1109 = vmatprep.mubr.bf16.mxu0 0
        %1110 = vmatmul.mubr.bf16.gmra.mrb[0].mxu0 %v1030
        %v1111 = vpop.f32.mrb[0].mxu0
        %v1112 = vadd.f32 0.0, %v1111
        %v1113 = vpop.f32.mrb[0].mxu0
        %v1114 = vpop.f32.mrb[0].mxu0
        %v1115 = vadd.f32 0.0, %v1114
        %v1116 = vpop.f32.mrb[0].mxu0
        %1117 = vmatprep.mubr.bf16.mxu0 0
        %1118 = vmatmul.mubr.bf16.gmra.mrb[0].mxu0 %v1033
        %v1119 = vpop.f32.mrb[0].mxu0
        %v1120 = vadd.f32 0.0, %v1119
        %v1121 = vpop.f32.mrb[0].mxu0
        %v1122 = vpop.f32.mrb[0].mxu0
        %v1123 = vadd.f32 0.0, %v1122
        %v1124 = vpop.f32.mrb[0].mxu0
        %1125 = vmatprep.mubr.bf16.mxu0 0
        %1126 = vmatmul.mubr.bf16.gmra.mrb[0].mxu0 %v1036
        %v1127 = vpop.f32.mrb[0].mxu0
        %v1128 = vadd.f32 0.0, %v1127
        %v1129 = vpop.f32.mrb[0].mxu0
        %v1130 = vpop.f32.mrb[0].mxu0
        %v1131 = vadd.f32 0.0, %v1130
        %v1132 = vpop.f32.mrb[0].mxu0
        %1133 = vmatprep.mubr.bf16.mxu0 0
        %1134 = vmatmul.mubr.bf16.gmra.mrb[0].mxu0 %v1039
        %v1135 = vpop.f32.mrb[0].mxu0
        %v1136 = vadd.f32 0.0, %v1135
        %v1137 = vpop.f32.mrb[0].mxu0
        %v1138 = vpop.f32.mrb[0].mxu0
        %v1139 = vadd.f32 0.0, %v1138
        %v1140 = vpop.f32.mrb[0].mxu0
        %1141 = vdwg.mxu0
        %v1142 = vpack.c.b16 %v720, %v718
        %v1143 = vpack.c.b16 %v724, %v722
        %v1144 = vpack.c.b16 %v728, %v726
        %v1145 = vpack.c.b16 %v732, %v730
        %v1146 = vpack.c.b16 %v734, %v718
        %v1147 = vpack.c.b16 %v738, %v736
        %v1148 = vpack.c.b16 %v742, %v740
        %v1149 = vpack.c.b16 %v746, %v744
        %v1151 = vsel %vm1016, %v1142, 0
        %v1154 = vsel %vm1016, %v1143, 0
        %v1157 = vsel %vm1016, %v1144, 0
        %v1160 = vsel %vm1016, %v1145, 0
        %v1163 = vsel %vm1016, %v1146, 0
        %v1166 = vsel %vm1016, %v1147, 0
        %v1169 = vsel %vm1016, %v1148, 0
        %v1172 = vsel %vm1016, %v1149, 0
        %v1175 = vsel %vm1041, %v702, 0
        %1177 = vmatprep.subr.bf16.mxu0 0
        %1178 = vmatpush1.bf16.msra.mxu0 %v1175
        %1179 = vmatprep.subr.bf16.mxu0 0
        %1180 = vmatpush1.bf16.msra.mxu0 0
        %1181 = vmatprep.subr.bf16.mxu0 0
        %1182 = vmatpush1.bf16.msra.mxu0 0
        %1183 = vmatprep.subr.bf16.mxu0 0
        %1184 = vmatpush1.bf16.msra.mxu0 0
        %1185 = vmatprep.subr.bf16.mxu0 0
        %1186 = vmatpush1.bf16.msra.mxu0 0
        %1187 = vmatprep.subr.bf16.mxu0 0
        %1188 = vmatpush1.bf16.msra.mxu0 0
        %1189 = vmatprep.subr.bf16.mxu0 0
        %1190 = vmatpush1.bf16.msra.mxu0 0
        %1191 = vmatprep.subr.bf16.mxu0 0
        %1192 = vmatpush1.bf16.msra.mxu0 0
        %1193 = vmatprep.subr.bf16.mxu0 0
        %1194 = vmatpush1.bf16.msra.mxu0 0
        %1195 = vmatprep.subr.bf16.mxu0 0
        %1196 = vmatpush1.bf16.msra.mxu0 0
        %1197 = vmatprep.subr.bf16.mxu0 0
        %1198 = vmatpush1.bf16.msra.mxu0 0
        %1199 = vmatprep.subr.bf16.mxu0 0
        %1200 = vmatpush1.bf16.msra.mxu0 0
        %1201 = vmatprep.subr.bf16.mxu0 0
        %1202 = vmatpush1.bf16.msra.mxu0 0
        %1203 = vmatprep.subr.bf16.mxu0 0
        %1204 = vmatpush1.bf16.msra.mxu0 0
        %1205 = vmatprep.subr.bf16.mxu0 0
        %1206 = vmatpush1.bf16.msra.mxu0 0
        %1207 = vmatprep.subr.bf16.mxu0 0
        %1208 = vmatpush1.bf16.msra.mxu0 0
        %1209 = vmatprep.mubr.bf16.mxu0 0
        %1210 = vmatmul.mubr.bf16.gmra.mrb[0].mxu0 %v1151
        %v1211 = vpop.f32.mrb[0].mxu0
        %v1212 = vadd.f32 %v1080, %v1211
        %v1213 = vpop.f32.mrb[0].mxu0
        %v1214 = vpop.f32.mrb[0].mxu0
        %v1215 = vadd.f32 %v1083, %v1214
        %v1216 = vpop.f32.mrb[0].mxu0
        %1217 = vmatprep.mubr.bf16.mxu0 0
        %1218 = vmatmul.mubr.bf16.gmra.mrb[0].mxu0 %v1154
        %v1219 = vpop.f32.mrb[0].mxu0
        %v1220 = vadd.f32 %v1088, %v1219
        %v1221 = vpop.f32.mrb[0].mxu0
        %v1222 = vpop.f32.mrb[0].mxu0
        %v1223 = vadd.f32 %v1091, %v1222
        %v1224 = vpop.f32.mrb[0].mxu0
        %1225 = vmatprep.mubr.bf16.mxu0 0
        %1226 = vmatmul.mubr.bf16.gmra.mrb[0].mxu0 %v1157
        %v1227 = vpop.f32.mrb[0].mxu0
        %v1228 = vadd.f32 %v1096, %v1227
        %v1229 = vpop.f32.mrb[0].mxu0
        %v1230 = vpop.f32.mrb[0].mxu0
        %v1231 = vadd.f32 %v1099, %v1230
        %v1232 = vpop.f32.mrb[0].mxu0
        %1233 = vmatprep.mubr.bf16.mxu0 0
        %1234 = vmatmul.mubr.bf16.gmra.mrb[0].mxu0 %v1160
        %v1235 = vpop.f32.mrb[0].mxu0
        %v1236 = vadd.f32 %v1104, %v1235
        %v1237 = vpop.f32.mrb[0].mxu0
        %v1238 = vpop.f32.mrb[0].mxu0
        %v1239 = vadd.f32 %v1107, %v1238
        %v1240 = vpop.f32.mrb[0].mxu0
        %1241 = vmatprep.mubr.bf16.mxu0 0
        %1242 = vmatmul.mubr.bf16.gmra.mrb[0].mxu0 %v1163
        %v1243 = vpop.f32.mrb[0].mxu0
        %v1244 = vadd.f32 %v1112, %v1243
        %v1245 = vpop.f32.mrb[0].mxu0
        %v1246 = vpop.f32.mrb[0].mxu0
        %v1247 = vadd.f32 %v1115, %v1246
        %v1248 = vpop.f32.mrb[0].mxu0
        %1249 = vmatprep.mubr.bf16.mxu0 0
        %1250 = vmatmul.mubr.bf16.gmra.mrb[0].mxu0 %v1166
        %v1251 = vpop.f32.mrb[0].mxu0
        %v1252 = vadd.f32 %v1120, %v1251
        %v1253 = vpop.f32.mrb[0].mxu0
        %v1254 = vpop.f32.mrb[0].mxu0
        %v1255 = vadd.f32 %v1123, %v1254
        %v1256 = vpop.f32.mrb[0].mxu0
        %1257 = vmatprep.mubr.bf16.mxu0 0
        %1258 = vmatmul.mubr.bf16.gmra.mrb[0].mxu0 %v1169
        %v1259 = vpop.f32.mrb[0].mxu0
        %v1260 = vadd.f32 %v1128, %v1259
        %v1261 = vpop.f32.mrb[0].mxu0
        %v1262 = vpop.f32.mrb[0].mxu0
        %v1263 = vadd.f32 %v1131, %v1262
        %v1264 = vpop.f32.mrb[0].mxu0
        %1265 = vmatprep.mubr.bf16.mxu0 0
        %1266 = vmatmul.mubr.bf16.gmra.mrb[0].mxu0 %v1172
        %v1267 = vpop.f32.mrb[0].mxu0
        %v1268 = vadd.f32 %v1136, %v1267
        %v1269 = vpop.f32.mrb[0].mxu0
        %v1270 = vpop.f32.mrb[0].mxu0
        %v1271 = vadd.f32 %v1139, %v1270
        %v1272 = vpop.f32.mrb[0].mxu0
        %1273 = vdwg.mxu0
        %vm1274 = vcmask 1042432
        %vm1275 = vcmask 1046532
        %vm1276 = vmor %vm1274, %vm1275
        %v1277 = vrot.slane %v748, 5
        %v1278 = vrot.slane %v1277, 4
        %v1279 = vrot.slane %v749, 5
        %v1280 = vsel %vm1276, %v1278, %v1279
        %v1281 = vrot.slane %v750, 5
        %v1282 = vrot.slane %v1281, 4
        %v1283 = vrot.slane %v751, 5
        %v1284 = vsel %vm1276, %v1282, %v1283
        %v1285 = vrot.slane %v752, 5
        %v1286 = vrot.slane %v1285, 4
        %v1287 = vrot.slane %v753, 5
        %v1288 = vsel %vm1276, %v1286, %v1287
        %v1289 = vrot.slane %v754, 5
        %v1290 = vrot.slane %v1289, 4
        %v1291 = vrot.slane %v755, 5
        %v1292 = vsel %vm1276, %v1290, %v1291
        %v1293 = vrot.slane %v756, 5
        %v1294 = vrot.slane %v1293, 4
        %v1295 = vrot.slane %v757, 5
        %v1296 = vsel %vm1276, %v1294, %v1295
        %v1297 = vrot.slane %v758, 5
        %v1298 = vrot.slane %v1297, 4
        %v1299 = vrot.slane %v759, 5
        %v1300 = vsel %vm1276, %v1298, %v1299
        %v1301 = vrot.slane %v760, 5
        %v1302 = vrot.slane %v1301, 4
        %v1303 = vrot.slane %v761, 5
        %v1304 = vsel %vm1276, %v1302, %v1303
        %v1305 = vrot.slane %v762, 5
        %v1306 = vrot.slane %v1305, 4
        %v1307 = vrot.slane %v763, 5
        %v1308 = vsel %vm1276, %v1306, %v1307
        %v1309 = vrot.slane %v764, 5
        %v1310 = vrot.slane %v1309, 4
        %v1311 = vrot.slane %v765, 5
        %v1312 = vsel %vm1276, %v1310, %v1311
        %v1313 = vrot.slane %v766, 5
        %v1314 = vrot.slane %v1313, 4
        %v1315 = vrot.slane %v767, 5
        %v1316 = vsel %vm1276, %v1314, %v1315
        %v1317 = vrot.slane %v768, 5
        %v1318 = vrot.slane %v1317, 4
        %v1319 = vrot.slane %v769, 5
        %v1320 = vsel %vm1276, %v1318, %v1319
        %v1321 = vrot.slane %v770, 5
        %v1322 = vrot.slane %v1321, 4
        %v1323 = vrot.slane %v771, 5
        %v1324 = vsel %vm1276, %v1322, %v1323
        %v1325 = vrot.slane %v772, 5
        %v1326 = vrot.slane %v1325, 4
        %v1327 = vrot.slane %v773, 5
        %v1328 = vsel %vm1276, %v1326, %v1327
        %v1329 = vrot.slane %v774, 5
        %v1330 = vrot.slane %v1329, 4
        %v1331 = vrot.slane %v775, 5
        %v1332 = vsel %vm1276, %v1330, %v1331
        %v1333 = vrot.slane %v776, 5
        %v1334 = vrot.slane %v1333, 4
        %v1335 = vrot.slane %v777, 5
        %v1336 = vsel %vm1276, %v1334, %v1335
        %s1337 = scalar_lea.vmem %s2, 4
        %v1338 = vld [vmem:[%s1337] sm:$0x3]
        %v1339 = vunpack.c.l.b16 %v1280
        %v1340 = vunpack.c.l.b16 %v1284
        %v1341 = vunpack.c.l.b16 %v1288
        %v1342 = vunpack.c.l.b16 %v1292
        %v1343 = vunpack.c.l.b16 %v1296
        %v1344 = vunpack.c.l.b16 %v1300
        %v1345 = vunpack.c.l.b16 %v1304
        %v1346 = vunpack.c.l.b16 %v1308
        %v1347 = vunpack.c.l.b16 %v1312
        %v1348 = vunpack.c.l.b16 %v1316
        %v1349 = vunpack.c.l.b16 %v1320
        %v1350 = vunpack.c.l.b16 %v1324
        %v1351 = vunpack.c.l.b16 %v1328
        %v1352 = vunpack.c.l.b16 %v1332
        %v1353 = vunpack.c.l.b16 %v1336
        %v1354 = vpack.c.b16 %v1340, %v1339
        %v1355 = vpack.c.b16 %v1342, %v1341
        %v1356 = vpack.c.b16 %v1344, %v1343
        %v1357 = vpack.c.b16 %v1346, %v1345
        %v1358 = vpack.c.b16 %v1347, %v1339
        %v1359 = vpack.c.b16 %v1349, %v1348
        %v1360 = vpack.c.b16 %v1351, %v1350
        %v1361 = vpack.c.b16 %v1353, %v1352
        %v1363 = vsel %vm1016, %v1354, 0
        %v1366 = vsel %vm1016, %v1355, 0
        %v1369 = vsel %vm1016, %v1356, 0
        %v1372 = vsel %vm1016, %v1357, 0
        %v1375 = vsel %vm1016, %v1358, 0
        %v1378 = vsel %vm1016, %v1359, 0
        %v1381 = vsel %vm1016, %v1360, 0
        %v1384 = vsel %vm1016, %v1361, 0
        %v1387 = vsel %vm1041, %v1338, 0
        %1389 = vmatprep.subr.bf16.mxu0 0
        %1390 = vmatpush1.bf16.msra.mxu0 %v1387
        %1391 = vmatprep.subr.bf16.mxu0 0
        %1392 = vmatpush1.bf16.msra.mxu0 0
        %1393 = vmatprep.subr.bf16.mxu0 0
        %1394 = vmatpush1.bf16.msra.mxu0 0
        %1395 = vmatprep.subr.bf16.mxu0 0
        %1396 = vmatpush1.bf16.msra.mxu0 0
        %1397 = vmatprep.subr.bf16.mxu0 0
        %1398 = vmatpush1.bf16.msra.mxu0 0
        %1399 = vmatprep.subr.bf16.mxu0 0
        %1400 = vmatpush1.bf16.msra.mxu0 0
        %1401 = vmatprep.subr.bf16.mxu0 0
        %1402 = vmatpush1.bf16.msra.mxu0 0
        %1403 = vmatprep.subr.bf16.mxu0 0
        %1404 = vmatpush1.bf16.msra.mxu0 0
        %1405 = vmatprep.subr.bf16.mxu0 0
        %1406 = vmatpush1.bf16.msra.mxu0 0
        %1407 = vmatprep.subr.bf16.mxu0 0
        %1408 = vmatpush1.bf16.msra.mxu0 0
        %1409 = vmatprep.subr.bf16.mxu0 0
        %1410 = vmatpush1.bf16.msra.mxu0 0
        %1411 = vmatprep.subr.bf16.mxu0 0
        %1412 = vmatpush1.bf16.msra.mxu0 0
        %1413 = vmatprep.subr.bf16.mxu0 0
        %1414 = vmatpush1.bf16.msra.mxu0 0
        %1415 = vmatprep.subr.bf16.mxu0 0
        %1416 = vmatpush1.bf16.msra.mxu0 0
        %1417 = vmatprep.subr.bf16.mxu0 0
        %1418 = vmatpush1.bf16.msra.mxu0 0
        %1419 = vmatprep.subr.bf16.mxu0 0
        %1420 = vmatpush1.bf16.msra.mxu0 0
        %1421 = vmatprep.mubr.bf16.mxu0 0
        %1422 = vmatmul.mubr.bf16.gmra.mrb[0].mxu0 %v1363
        %v1423 = vpop.f32.mrb[0].mxu0
        %v1424 = vadd.f32 0.0, %v1423
        %v1425 = vpop.f32.mrb[0].mxu0
        %v1426 = vpop.f32.mrb[0].mxu0
        %v1427 = vadd.f32 0.0, %v1426
        %v1428 = vpop.f32.mrb[0].mxu0
        %1429 = vmatprep.mubr.bf16.mxu0 0
        %1430 = vmatmul.mubr.bf16.gmra.mrb[0].mxu0 %v1366
        %v1431 = vpop.f32.mrb[0].mxu0
        %v1432 = vadd.f32 0.0, %v1431
        %v1433 = vpop.f32.mrb[0].mxu0
        %v1434 = vpop.f32.mrb[0].mxu0
        %v1435 = vadd.f32 0.0, %v1434
        %v1436 = vpop.f32.mrb[0].mxu0
        %1437 = vmatprep.mubr.bf16.mxu0 0
        %1438 = vmatmul.mubr.bf16.gmra.mrb[0].mxu0 %v1369
        %v1439 = vpop.f32.mrb[0].mxu0
        %v1440 = vadd.f32 0.0, %v1439
        %v1441 = vpop.f32.mrb[0].mxu0
        %v1442 = vpop.f32.mrb[0].mxu0
        %v1443 = vadd.f32 0.0, %v1442
        %v1444 = vpop.f32.mrb[0].mxu0
        %1445 = vmatprep.mubr.bf16.mxu0 0
        %1446 = vmatmul.mubr.bf16.gmra.mrb[0].mxu0 %v1372
        %v1447 = vpop.f32.mrb[0].mxu0
        %v1448 = vadd.f32 0.0, %v1447
        %v1449 = vpop.f32.mrb[0].mxu0
        %v1450 = vpop.f32.mrb[0].mxu0
        %v1451 = vadd.f32 0.0, %v1450
        %v1452 = vpop.f32.mrb[0].mxu0
        %1453 = vmatprep.mubr.bf16.mxu0 0
        %1454 = vmatmul.mubr.bf16.gmra.mrb[0].mxu0 %v1375
        %v1455 = vpop.f32.mrb[0].mxu0
        %v1456 = vadd.f32 0.0, %v1455
        %v1457 = vpop.f32.mrb[0].mxu0
        %v1458 = vpop.f32.mrb[0].mxu0
        %v1459 = vadd.f32 0.0, %v1458
        %v1460 = vpop.f32.mrb[0].mxu0
        %1461 = vmatprep.mubr.bf16.mxu0 0
        %1462 = vmatmul.mubr.bf16.gmra.mrb[0].mxu0 %v1378
        %v1463 = vpop.f32.mrb[0].mxu0
        %v1464 = vadd.f32 0.0, %v1463
        %v1465 = vpop.f32.mrb[0].mxu0
        %v1466 = vpop.f32.mrb[0].mxu0
        %v1467 = vadd.f32 0.0, %v1466
        %v1468 = vpop.f32.mrb[0].mxu0
        %1469 = vmatprep.mubr.bf16.mxu0 0
        %1470 = vmatmul.mubr.bf16.gmra.mrb[0].mxu0 %v1381
        %v1471 = vpop.f32.mrb[0].mxu0
        %v1472 = vadd.f32 0.0, %v1471
        %v1473 = vpop.f32.mrb[0].mxu0
        %v1474 = vpop.f32.mrb[0].mxu0
        %v1475 = vadd.f32 0.0, %v1474
        %v1476 = vpop.f32.mrb[0].mxu0
        %1477 = vmatprep.mubr.bf16.mxu0 0
        %1478 = vmatmul.mubr.bf16.gmra.mrb[0].mxu0 %v1384
        %v1479 = vpop.f32.mrb[0].mxu0
        %v1480 = vadd.f32 0.0, %v1479
        %v1481 = vpop.f32.mrb[0].mxu0
        %v1482 = vpop.f32.mrb[0].mxu0
        %v1483 = vadd.f32 0.0, %v1482
        %v1484 = vpop.f32.mrb[0].mxu0
        %1485 = vdwg.mxu0
        %v1486 = vadd.f32 %v1212, %v1424
        %v1487 = vadd.f32 %v1215, %v1427
        %v1488 = vadd.f32 %v1220, %v1432
        %v1489 = vadd.f32 %v1223, %v1435
        %v1490 = vadd.f32 %v1228, %v1440
        %v1491 = vadd.f32 %v1231, %v1443
        %v1492 = vadd.f32 %v1236, %v1448
        %v1493 = vadd.f32 %v1239, %v1451
        %v1494 = vadd.f32 %v1244, %v1456
        %v1495 = vadd.f32 %v1247, %v1459
        %v1496 = vadd.f32 %v1252, %v1464
        %v1497 = vadd.f32 %v1255, %v1467
        %v1498 = vadd.f32 %v1260, %v1472
        %v1499 = vadd.f32 %v1263, %v1475
        %v1500 = vadd.f32 %v1268, %v1480
        %v1501 = vadd.f32 %v1271, %v1483
        %s1502 = scalar_lea.vmem %s2, 6
        %v1503 = vld [vmem:[%s1502] sm:$0x3]
        %v1506 = vunpack.c.l.b16 %v693
        %v1507 = vunpack.c.l.b16 %v701
        %v1508 = vpack.c.b16 %v722, %v720
        %v1509 = vpack.c.b16 %v726, %v724
        %v1510 = vpack.c.b16 %v730, %v728
        %v1511 = vpack.c.b16 %v1506, %v732
        %v1512 = vpack.c.b16 %v736, %v734
        %v1513 = vpack.c.b16 %v740, %v738
        %v1514 = vpack.c.b16 %v744, %v742
        %v1515 = vpack.c.b16 %v1507, %v746
        %v1517 = vsel %vm1016, %v1508, 0
        %v1520 = vsel %vm1016, %v1509, 0
        %v1523 = vsel %vm1016, %v1510, 0
        %v1526 = vsel %vm1016, %v1511, 0
        %v1529 = vsel %vm1016, %v1512, 0
        %v1532 = vsel %vm1016, %v1513, 0
        %v1535 = vsel %vm1016, %v1514, 0
        %v1538 = vsel %vm1016, %v1515, 0
        %v1541 = vsel %vm1041, %v1503, 0
        %1543 = vmatprep.subr.bf16.mxu0 0
        %1544 = vmatpush1.bf16.msra.mxu0 %v1541
        %1545 = vmatprep.subr.bf16.mxu0 0
        %1546 = vmatpush1.bf16.msra.mxu0 0
        %1547 = vmatprep.subr.bf16.mxu0 0
        %1548 = vmatpush1.bf16.msra.mxu0 0
        %1549 = vmatprep.subr.bf16.mxu0 0
        %1550 = vmatpush1.bf16.msra.mxu0 0
        %1551 = vmatprep.subr.bf16.mxu0 0
        %1552 = vmatpush1.bf16.msra.mxu0 0
        %1553 = vmatprep.subr.bf16.mxu0 0
        %1554 = vmatpush1.bf16.msra.mxu0 0
        %1555 = vmatprep.subr.bf16.mxu0 0
        %1556 = vmatpush1.bf16.msra.mxu0 0
        %1557 = vmatprep.subr.bf16.mxu0 0
        %1558 = vmatpush1.bf16.msra.mxu0 0
        %1559 = vmatprep.subr.bf16.mxu0 0
        %1560 = vmatpush1.bf16.msra.mxu0 0
        %1561 = vmatprep.subr.bf16.mxu0 0
        %1562 = vmatpush1.bf16.msra.mxu0 0
        %1563 = vmatprep.subr.bf16.mxu0 0
        %1564 = vmatpush1.bf16.msra.mxu0 0
        %1565 = vmatprep.subr.bf16.mxu0 0
        %1566 = vmatpush1.bf16.msra.mxu0 0
        %1567 = vmatprep.subr.bf16.mxu0 0
        %1568 = vmatpush1.bf16.msra.mxu0 0
        %1569 = vmatprep.subr.bf16.mxu0 0
        %1570 = vmatpush1.bf16.msra.mxu0 0
        %1571 = vmatprep.subr.bf16.mxu0 0
        %1572 = vmatpush1.bf16.msra.mxu0 0
        %1573 = vmatprep.subr.bf16.mxu0 0
        %1574 = vmatpush1.bf16.msra.mxu0 0
        %1575 = vmatprep.mubr.bf16.mxu0 0
        %1576 = vmatmul.mubr.bf16.gmra.mrb[0].mxu0 %v1517
        %v1577 = vpop.f32.mrb[0].mxu0
        %v1578 = vadd.f32 0.0, %v1577
        %v1579 = vpop.f32.mrb[0].mxu0
        %v1580 = vpop.f32.mrb[0].mxu0
        %v1581 = vadd.f32 0.0, %v1580
        %v1582 = vpop.f32.mrb[0].mxu0
        %1583 = vmatprep.mubr.bf16.mxu0 0
        %1584 = vmatmul.mubr.bf16.gmra.mrb[0].mxu0 %v1520
        %v1585 = vpop.f32.mrb[0].mxu0
        %v1586 = vadd.f32 0.0, %v1585
        %v1587 = vpop.f32.mrb[0].mxu0
        %v1588 = vpop.f32.mrb[0].mxu0
        %v1589 = vadd.f32 0.0, %v1588
        %v1590 = vpop.f32.mrb[0].mxu0
        %1591 = vmatprep.mubr.bf16.mxu0 0
        %1592 = vmatmul.mubr.bf16.gmra.mrb[0].mxu0 %v1523
        %v1593 = vpop.f32.mrb[0].mxu0
        %v1594 = vadd.f32 0.0, %v1593
        %v1595 = vpop.f32.mrb[0].mxu0
        %v1596 = vpop.f32.mrb[0].mxu0
        %v1597 = vadd.f32 0.0, %v1596
        %v1598 = vpop.f32.mrb[0].mxu0
        %1599 = vmatprep.mubr.bf16.mxu0 0
        %1600 = vmatmul.mubr.bf16.gmra.mrb[0].mxu0 %v1526
        %v1601 = vpop.f32.mrb[0].mxu0
        %v1602 = vadd.f32 0.0, %v1601
        %v1603 = vpop.f32.mrb[0].mxu0
        %v1604 = vpop.f32.mrb[0].mxu0
        %v1605 = vadd.f32 0.0, %v1604
        %v1606 = vpop.f32.mrb[0].mxu0
        %1607 = vmatprep.mubr.bf16.mxu0 0
        %1608 = vmatmul.mubr.bf16.gmra.mrb[0].mxu0 %v1529
        %v1609 = vpop.f32.mrb[0].mxu0
        %v1610 = vadd.f32 0.0, %v1609
        %v1611 = vpop.f32.mrb[0].mxu0
        %v1612 = vpop.f32.mrb[0].mxu0
        %v1613 = vadd.f32 0.0, %v1612
        %v1614 = vpop.f32.mrb[0].mxu0
        %1615 = vmatprep.mubr.bf16.mxu0 0
        %1616 = vmatmul.mubr.bf16.gmra.mrb[0].mxu0 %v1532
        %v1617 = vpop.f32.mrb[0].mxu0
        %v1618 = vadd.f32 0.0, %v1617
        %v1619 = vpop.f32.mrb[0].mxu0
        %v1620 = vpop.f32.mrb[0].mxu0
        %v1621 = vadd.f32 0.0, %v1620
        %v1622 = vpop.f32.mrb[0].mxu0
        %1623 = vmatprep.mubr.bf16.mxu0 0
        %1624 = vmatmul.mubr.bf16.gmra.mrb[0].mxu0 %v1535
        %v1625 = vpop.f32.mrb[0].mxu0
        %v1626 = vadd.f32 0.0, %v1625
        %v1627 = vpop.f32.mrb[0].mxu0
        %v1628 = vpop.f32.mrb[0].mxu0
        %v1629 = vadd.f32 0.0, %v1628
        %v1630 = vpop.f32.mrb[0].mxu0
        %1631 = vmatprep.mubr.bf16.mxu0 0
        %1632 = vmatmul.mubr.bf16.gmra.mrb[0].mxu0 %v1538
        %v1633 = vpop.f32.mrb[0].mxu0
        %v1634 = vadd.f32 0.0, %v1633
        %v1635 = vpop.f32.mrb[0].mxu0
        %v1636 = vpop.f32.mrb[0].mxu0
        %v1637 = vadd.f32 0.0, %v1636
        %v1638 = vpop.f32.mrb[0].mxu0
        %1639 = vdwg.mxu0
        %v1640 = vadd.f32 %v1486, %v1578
        %v1641 = vadd.f32 %v1487, %v1581
        %v1642 = vadd.f32 %v1488, %v1586
        %v1643 = vadd.f32 %v1489, %v1589
        %v1644 = vadd.f32 %v1490, %v1594
        %v1645 = vadd.f32 %v1491, %v1597
        %v1646 = vadd.f32 %v1492, %v1602
        %v1647 = vadd.f32 %v1493, %v1605
        %v1648 = vadd.f32 %v1494, %v1610
        %v1649 = vadd.f32 %v1495, %v1613
        %v1650 = vadd.f32 %v1496, %v1618
        %v1651 = vadd.f32 %v1497, %v1621
        %v1652 = vadd.f32 %v1498, %v1626
        %v1653 = vadd.f32 %v1499, %v1629
        %v1654 = vadd.f32 %v1500, %v1634
        %v1655 = vadd.f32 %v1501, %v1637
        %v1656 = vunpack.c.h.b16 %v693
        %v1657 = vunpack.c.h.b16 %v701
        %v1658 = vpack.c.b16 %v1506, %v1506
        %v1659 = vpack.c.b16 %v1656, %v1656
        %v1660 = vpack.c.b16 %v1507, %v1507
        %v1661 = vpack.c.b16 %v1657, %v1657
        %v1663 = vshrl.u32 %v1658, 16
        %v1665 = vrot.slane %v1663, 4
        %v1666 = vshll.u32 %v1658, 16
        %v1668 = vrot.slane %v1666, 5
        %v1669 = vor.u32 %v1665, %v1668
        %v1670 = vrot.slane %v1669, 4
        %v1672 = vshll.u32 %v1659, 16
        %v1674 = vrot.slane %v1672, 5
        %v1675 = vsel %vm780, %v1670, %v1674
        %v1677 = vshrl.u32 %v1660, 16
        %v1679 = vrot.slane %v1677, 4
        %v1680 = vshll.u32 %v1660, 16
        %v1682 = vrot.slane %v1680, 5
        %v1683 = vor.u32 %v1679, %v1682
        %v1684 = vrot.slane %v1683, 4
        %v1686 = vshll.u32 %v1661, 16
        %v1688 = vrot.slane %v1686, 5
        %v1689 = vsel %vm780, %v1684, %v1688
        %s1690 = scalar_lea.vmem %s2, 8
        %v1691 = vld [vmem:[%s1690] sm:$0x3]
        %v1692 = vunpack.c.l.b16 %v1675
        %v1693 = vunpack.c.l.b16 %v1689
        %v1694 = vpack.c.b16 %v995, %v994
        %v1695 = vpack.c.b16 %v997, %v996
        %v1696 = vpack.c.b16 %v999, %v998
        %v1697 = vpack.c.b16 %v1692, %v1000
        %v1698 = vpack.c.b16 %v1002, %v1001
        %v1699 = vpack.c.b16 %v1004, %v1003
        %v1700 = vpack.c.b16 %v1006, %v1005
        %v1701 = vpack.c.b16 %v1693, %v1007
        %v1703 = vsel %vm1016, %v1694, 0
        %v1706 = vsel %vm1016, %v1695, 0
        %v1709 = vsel %vm1016, %v1696, 0
        %v1712 = vsel %vm1016, %v1697, 0
        %v1715 = vsel %vm1016, %v1698, 0
        %v1718 = vsel %vm1016, %v1699, 0
        %v1721 = vsel %vm1016, %v1700, 0
        %v1724 = vsel %vm1016, %v1701, 0
        %v1727 = vsel %vm1041, %v1691, 0
        %1729 = vmatprep.subr.bf16.mxu0 0
        %1730 = vmatpush1.bf16.msra.mxu0 %v1727
        %1731 = vmatprep.subr.bf16.mxu0 0
        %1732 = vmatpush1.bf16.msra.mxu0 0
        %1733 = vmatprep.subr.bf16.mxu0 0
        %1734 = vmatpush1.bf16.msra.mxu0 0
        %1735 = vmatprep.subr.bf16.mxu0 0
        %1736 = vmatpush1.bf16.msra.mxu0 0
        %1737 = vmatprep.subr.bf16.mxu0 0
        %1738 = vmatpush1.bf16.msra.mxu0 0
        %1739 = vmatprep.subr.bf16.mxu0 0
        %1740 = vmatpush1.bf16.msra.mxu0 0
        %1741 = vmatprep.subr.bf16.mxu0 0
        %1742 = vmatpush1.bf16.msra.mxu0 0
        %1743 = vmatprep.subr.bf16.mxu0 0
        %1744 = vmatpush1.bf16.msra.mxu0 0
        %1745 = vmatprep.subr.bf16.mxu0 0
        %1746 = vmatpush1.bf16.msra.mxu0 0
        %1747 = vmatprep.subr.bf16.mxu0 0
        %1748 = vmatpush1.bf16.msra.mxu0 0
        %1749 = vmatprep.subr.bf16.mxu0 0
        %1750 = vmatpush1.bf16.msra.mxu0 0
        %1751 = vmatprep.subr.bf16.mxu0 0
        %1752 = vmatpush1.bf16.msra.mxu0 0
        %1753 = vmatprep.subr.bf16.mxu0 0
        %1754 = vmatpush1.bf16.msra.mxu0 0
        %1755 = vmatprep.subr.bf16.mxu0 0
        %1756 = vmatpush1.bf16.msra.mxu0 0
        %1757 = vmatprep.subr.bf16.mxu0 0
        %1758 = vmatpush1.bf16.msra.mxu0 0
        %1759 = vmatprep.subr.bf16.mxu0 0
        %1760 = vmatpush1.bf16.msra.mxu0 0
        %1761 = vmatprep.mubr.bf16.mxu0 0
        %1762 = vmatmul.mubr.bf16.gmra.mrb[0].mxu0 %v1703
        %v1763 = vpop.f32.mrb[0].mxu0
        %v1764 = vadd.f32 0.0, %v1763
        %v1765 = vpop.f32.mrb[0].mxu0
        %v1766 = vpop.f32.mrb[0].mxu0
        %v1767 = vadd.f32 0.0, %v1766
        %v1768 = vpop.f32.mrb[0].mxu0
        %1769 = vmatprep.mubr.bf16.mxu0 0
        %1770 = vmatmul.mubr.bf16.gmra.mrb[0].mxu0 %v1706
        %v1771 = vpop.f32.mrb[0].mxu0
        %v1772 = vadd.f32 0.0, %v1771
        %v1773 = vpop.f32.mrb[0].mxu0
        %v1774 = vpop.f32.mrb[0].mxu0
        %v1775 = vadd.f32 0.0, %v1774
        %v1776 = vpop.f32.mrb[0].mxu0
        %1777 = vmatprep.mubr.bf16.mxu0 0
        %1778 = vmatmul.mubr.bf16.gmra.mrb[0].mxu0 %v1709
        %v1779 = vpop.f32.mrb[0].mxu0
        %v1780 = vadd.f32 0.0, %v1779
        %v1781 = vpop.f32.mrb[0].mxu0
        %v1782 = vpop.f32.mrb[0].mxu0
        %v1783 = vadd.f32 0.0, %v1782
        %v1784 = vpop.f32.mrb[0].mxu0
        %1785 = vmatprep.mubr.bf16.mxu0 0
        %1786 = vmatmul.mubr.bf16.gmra.mrb[0].mxu0 %v1712
        %v1787 = vpop.f32.mrb[0].mxu0
        %v1788 = vadd.f32 0.0, %v1787
        %v1789 = vpop.f32.mrb[0].mxu0
        %v1790 = vpop.f32.mrb[0].mxu0
        %v1791 = vadd.f32 0.0, %v1790
        %v1792 = vpop.f32.mrb[0].mxu0
        %1793 = vmatprep.mubr.bf16.mxu0 0
        %1794 = vmatmul.mubr.bf16.gmra.mrb[0].mxu0 %v1715
        %v1795 = vpop.f32.mrb[0].mxu0
        %v1796 = vadd.f32 0.0, %v1795
        %v1797 = vpop.f32.mrb[0].mxu0
        %v1798 = vpop.f32.mrb[0].mxu0
        %v1799 = vadd.f32 0.0, %v1798
        %v1800 = vpop.f32.mrb[0].mxu0
        %1801 = vmatprep.mubr.bf16.mxu0 0
        %1802 = vmatmul.mubr.bf16.gmra.mrb[0].mxu0 %v1718
        %v1803 = vpop.f32.mrb[0].mxu0
        %v1804 = vadd.f32 0.0, %v1803
        %v1805 = vpop.f32.mrb[0].mxu0
        %v1806 = vpop.f32.mrb[0].mxu0
        %v1807 = vadd.f32 0.0, %v1806
        %v1808 = vpop.f32.mrb[0].mxu0
        %1809 = vmatprep.mubr.bf16.mxu0 0
        %1810 = vmatmul.mubr.bf16.gmra.mrb[0].mxu0 %v1721
        %v1811 = vpop.f32.mrb[0].mxu0
        %v1812 = vadd.f32 0.0, %v1811
        %v1813 = vpop.f32.mrb[0].mxu0
        %v1814 = vpop.f32.mrb[0].mxu0
        %v1815 = vadd.f32 0.0, %v1814
        %v1816 = vpop.f32.mrb[0].mxu0
        %1817 = vmatprep.mubr.bf16.mxu0 0
        %1818 = vmatmul.mubr.bf16.gmra.mrb[0].mxu0 %v1724
        %v1819 = vpop.f32.mrb[0].mxu0
        %v1820 = vadd.f32 0.0, %v1819
        %v1821 = vpop.f32.mrb[0].mxu0
        %v1822 = vpop.f32.mrb[0].mxu0
        %v1823 = vadd.f32 0.0, %v1822
        %v1824 = vpop.f32.mrb[0].mxu0
        %1825 = vdwg.mxu0
        %v1826 = vadd.f32 %v1640, %v1764
        %v1827 = vadd.f32 %v1641, %v1767
        %v1828 = vadd.f32 %v1642, %v1772
        %v1829 = vadd.f32 %v1643, %v1775
        %v1830 = vadd.f32 %v1644, %v1780
        %v1831 = vadd.f32 %v1645, %v1783
        %v1832 = vadd.f32 %v1646, %v1788
        %v1833 = vadd.f32 %v1647, %v1791
        %v1834 = vadd.f32 %v1648, %v1796
        %v1835 = vadd.f32 %v1649, %v1799
        %v1836 = vadd.f32 %v1650, %v1804
        %v1837 = vadd.f32 %v1651, %v1807
        %v1838 = vadd.f32 %v1652, %v1812
        %v1839 = vadd.f32 %v1653, %v1815
        %v1840 = vadd.f32 %v1654, %v1820
        %v1841 = vadd.f32 %v1655, %v1823
        %v1842 = vrot.slane %v1658, 5
        %v1843 = vrot.slane %v1842, 4
        %v1844 = vrot.slane %v1659, 5
        %v1845 = vsel %vm1276, %v1843, %v1844
        %v1846 = vrot.slane %v1660, 5
        %v1847 = vrot.slane %v1846, 4
        %v1848 = vrot.slane %v1661, 5
        %v1849 = vsel %vm1276, %v1847, %v1848
        %s1850 = scalar_lea.vmem %s2, 10
        %v1851 = vld [vmem:[%s1850] sm:$0x3]
        %v1852 = vunpack.c.l.b16 %v1845
        %v1853 = vunpack.c.l.b16 %v1849
        %v1854 = vpack.c.b16 %v1341, %v1340
        %v1855 = vpack.c.b16 %v1343, %v1342
        %v1856 = vpack.c.b16 %v1345, %v1344
        %v1857 = vpack.c.b16 %v1852, %v1346
        %v1858 = vpack.c.b16 %v1348, %v1347
        %v1859 = vpack.c.b16 %v1350, %v1349
        %v1860 = vpack.c.b16 %v1352, %v1351
        %v1861 = vpack.c.b16 %v1853, %v1353
        %v1863 = vsel %vm1016, %v1854, 0
        %v1866 = vsel %vm1016, %v1855, 0
        %v1869 = vsel %vm1016, %v1856, 0
        %v1872 = vsel %vm1016, %v1857, 0
        %v1875 = vsel %vm1016, %v1858, 0
        %v1878 = vsel %vm1016, %v1859, 0
        %v1881 = vsel %vm1016, %v1860, 0
        %v1884 = vsel %vm1016, %v1861, 0
        %v1887 = vsel %vm1041, %v1851, 0
        %1889 = vmatprep.subr.bf16.mxu0 0
        %1890 = vmatpush1.bf16.msra.mxu0 %v1887
        %1891 = vmatprep.subr.bf16.mxu0 0
        %1892 = vmatpush1.bf16.msra.mxu0 0
        %1893 = vmatprep.subr.bf16.mxu0 0
        %1894 = vmatpush1.bf16.msra.mxu0 0
        %1895 = vmatprep.subr.bf16.mxu0 0
        %1896 = vmatpush1.bf16.msra.mxu0 0
        %1897 = vmatprep.subr.bf16.mxu0 0
        %1898 = vmatpush1.bf16.msra.mxu0 0
        %1899 = vmatprep.subr.bf16.mxu0 0
        %1900 = vmatpush1.bf16.msra.mxu0 0
        %1901 = vmatprep.subr.bf16.mxu0 0
        %1902 = vmatpush1.bf16.msra.mxu0 0
        %1903 = vmatprep.subr.bf16.mxu0 0
        %1904 = vmatpush1.bf16.msra.mxu0 0
        %1905 = vmatprep.subr.bf16.mxu0 0
        %1906 = vmatpush1.bf16.msra.mxu0 0
        %1907 = vmatprep.subr.bf16.mxu0 0
        %1908 = vmatpush1.bf16.msra.mxu0 0
        %1909 = vmatprep.subr.bf16.mxu0 0
        %1910 = vmatpush1.bf16.msra.mxu0 0
        %1911 = vmatprep.subr.bf16.mxu0 0
        %1912 = vmatpush1.bf16.msra.mxu0 0
        %1913 = vmatprep.subr.bf16.mxu0 0
        %1914 = vmatpush1.bf16.msra.mxu0 0
        %1915 = vmatprep.subr.bf16.mxu0 0
        %1916 = vmatpush1.bf16.msra.mxu0 0
        %1917 = vmatprep.subr.bf16.mxu0 0
        %1918 = vmatpush1.bf16.msra.mxu0 0
        %1919 = vmatprep.subr.bf16.mxu0 0
        %1920 = vmatpush1.bf16.msra.mxu0 0
        %1921 = vmatprep.mubr.bf16.mxu0 0
        %1922 = vmatmul.mubr.bf16.gmra.mrb[0].mxu0 %v1863
        %v1923 = vpop.f32.mrb[0].mxu0
        %v1924 = vadd.f32 0.0, %v1923
        %v1925 = vpop.f32.mrb[0].mxu0
        %v1926 = vpop.f32.mrb[0].mxu0
        %v1927 = vadd.f32 0.0, %v1926
        %v1928 = vpop.f32.mrb[0].mxu0
        %1929 = vmatprep.mubr.bf16.mxu0 0
        %1930 = vmatmul.mubr.bf16.gmra.mrb[0].mxu0 %v1866
        %v1931 = vpop.f32.mrb[0].mxu0
        %v1932 = vadd.f32 0.0, %v1931
        %v1933 = vpop.f32.mrb[0].mxu0
        %v1934 = vpop.f32.mrb[0].mxu0
        %v1935 = vadd.f32 0.0, %v1934
        %v1936 = vpop.f32.mrb[0].mxu0
        %1937 = vmatprep.mubr.bf16.mxu0 0
        %1938 = vmatmul.mubr.bf16.gmra.mrb[0].mxu0 %v1869
        %v1939 = vpop.f32.mrb[0].mxu0
        %v1940 = vadd.f32 0.0, %v1939
        %v1941 = vpop.f32.mrb[0].mxu0
        %v1942 = vpop.f32.mrb[0].mxu0
        %v1943 = vadd.f32 0.0, %v1942
        %v1944 = vpop.f32.mrb[0].mxu0
        %1945 = vmatprep.mubr.bf16.mxu0 0
        %1946 = vmatmul.mubr.bf16.gmra.mrb[0].mxu0 %v1872
        %v1947 = vpop.f32.mrb[0].mxu0
        %v1948 = vadd.f32 0.0, %v1947
        %v1949 = vpop.f32.mrb[0].mxu0
        %v1950 = vpop.f32.mrb[0].mxu0
        %v1951 = vadd.f32 0.0, %v1950
        %v1952 = vpop.f32.mrb[0].mxu0
        %1953 = vmatprep.mubr.bf16.mxu0 0
        %1954 = vmatmul.mubr.bf16.gmra.mrb[0].mxu0 %v1875
        %v1955 = vpop.f32.mrb[0].mxu0
        %v1956 = vadd.f32 0.0, %v1955
        %v1957 = vpop.f32.mrb[0].mxu0
        %v1958 = vpop.f32.mrb[0].mxu0
        %v1959 = vadd.f32 0.0, %v1958
        %v1960 = vpop.f32.mrb[0].mxu0
        %1961 = vmatprep.mubr.bf16.mxu0 0
        %1962 = vmatmul.mubr.bf16.gmra.mrb[0].mxu0 %v1878
        %v1963 = vpop.f32.mrb[0].mxu0
        %v1964 = vadd.f32 0.0, %v1963
        %v1965 = vpop.f32.mrb[0].mxu0
        %v1966 = vpop.f32.mrb[0].mxu0
        %v1967 = vadd.f32 0.0, %v1966
        %v1968 = vpop.f32.mrb[0].mxu0
        %1969 = vmatprep.mubr.bf16.mxu0 0
        %1970 = vmatmul.mubr.bf16.gmra.mrb[0].mxu0 %v1881
        %v1971 = vpop.f32.mrb[0].mxu0
        %v1972 = vadd.f32 0.0, %v1971
        %v1973 = vpop.f32.mrb[0].mxu0
        %v1974 = vpop.f32.mrb[0].mxu0
        %v1975 = vadd.f32 0.0, %v1974
        %v1976 = vpop.f32.mrb[0].mxu0
        %1977 = vmatprep.mubr.bf16.mxu0 0
        %1978 = vmatmul.mubr.bf16.gmra.mrb[0].mxu0 %v1884
        %v1979 = vpop.f32.mrb[0].mxu0
        %v1980 = vadd.f32 0.0, %v1979
        %v1981 = vpop.f32.mrb[0].mxu0
        %v1982 = vpop.f32.mrb[0].mxu0
        %v1983 = vadd.f32 0.0, %v1982
        %v1984 = vpop.f32.mrb[0].mxu0
        %1985 = vdwg.mxu0
        %v1986 = vadd.f32 %v1826, %v1924
        %v1987 = vadd.f32 %v1827, %v1927
        %v1988 = vadd.f32 %v1828, %v1932
        %v1989 = vadd.f32 %v1829, %v1935
        %v1990 = vadd.f32 %v1830, %v1940
        %v1991 = vadd.f32 %v1831, %v1943
        %v1992 = vadd.f32 %v1832, %v1948
        %v1993 = vadd.f32 %v1833, %v1951
        %v1994 = vadd.f32 %v1834, %v1956
        %v1995 = vadd.f32 %v1835, %v1959
        %v1996 = vadd.f32 %v1836, %v1964
        %v1997 = vadd.f32 %v1837, %v1967
        %v1998 = vadd.f32 %v1838, %v1972
        %v1999 = vadd.f32 %v1839, %v1975
        %v2000 = vadd.f32 %v1840, %v1980
        %v2001 = vadd.f32 %v1841, %v1983
        %s2002 = scalar_lea.vmem %s2, 12
        %v2003 = vld [vmem:[%s2002] sm:$0x3]
        %v2004 = vpack.c.b16 %v718, %v1506
        %v2005 = vpack.c.b16 %v718, %v1507
        %v2007 = vsel %vm1016, %v2004, 0
        %v2010 = vsel %vm1016, %v2005, 0
        %v2013 = vsel %vm1041, %v2003, 0
        %2015 = vmatprep.subr.bf16.mxu0 0
        %2016 = vmatpush1.bf16.msra.mxu0 %v2013
        %2017 = vmatprep.subr.bf16.mxu0 0
        %2018 = vmatpush1.bf16.msra.mxu0 0
        %2019 = vmatprep.subr.bf16.mxu0 0
        %2020 = vmatpush1.bf16.msra.mxu0 0
        %2021 = vmatprep.subr.bf16.mxu0 0
        %2022 = vmatpush1.bf16.msra.mxu0 0
        %2023 = vmatprep.subr.bf16.mxu0 0
        %2024 = vmatpush1.bf16.msra.mxu0 0
        %2025 = vmatprep.subr.bf16.mxu0 0
        %2026 = vmatpush1.bf16.msra.mxu0 0
        %2027 = vmatprep.subr.bf16.mxu0 0
        %2028 = vmatpush1.bf16.msra.mxu0 0
        %2029 = vmatprep.subr.bf16.mxu0 0
        %2030 = vmatpush1.bf16.msra.mxu0 0
        %2031 = vmatprep.subr.bf16.mxu0 0
        %2032 = vmatpush1.bf16.msra.mxu0 0
        %2033 = vmatprep.subr.bf16.mxu0 0
        %2034 = vmatpush1.bf16.msra.mxu0 0
        %2035 = vmatprep.subr.bf16.mxu0 0
        %2036 = vmatpush1.bf16.msra.mxu0 0
        %2037 = vmatprep.subr.bf16.mxu0 0
        %2038 = vmatpush1.bf16.msra.mxu0 0
        %2039 = vmatprep.subr.bf16.mxu0 0
        %2040 = vmatpush1.bf16.msra.mxu0 0
        %2041 = vmatprep.subr.bf16.mxu0 0
        %2042 = vmatpush1.bf16.msra.mxu0 0
        %2043 = vmatprep.subr.bf16.mxu0 0
        %2044 = vmatpush1.bf16.msra.mxu0 0
        %2045 = vmatprep.subr.bf16.mxu0 0
        %2046 = vmatpush1.bf16.msra.mxu0 0
        %2047 = vmatprep.mubr.bf16.mxu0 0
        %2048 = vmatmul.mubr.bf16.gmra.mrb[0].mxu0 %v1154
        %v2049 = vpop.f32.mrb[0].mxu0
        %v2050 = vadd.f32 0.0, %v2049
        %v2051 = vpop.f32.mrb[0].mxu0
        %v2052 = vpop.f32.mrb[0].mxu0
        %v2053 = vadd.f32 0.0, %v2052
        %v2054 = vpop.f32.mrb[0].mxu0
        %2055 = vmatprep.mubr.bf16.mxu0 0
        %2056 = vmatmul.mubr.bf16.gmra.mrb[0].mxu0 %v1157
        %v2057 = vpop.f32.mrb[0].mxu0
        %v2058 = vadd.f32 0.0, %v2057
        %v2059 = vpop.f32.mrb[0].mxu0
        %v2060 = vpop.f32.mrb[0].mxu0
        %v2061 = vadd.f32 0.0, %v2060
        %v2062 = vpop.f32.mrb[0].mxu0
        %2063 = vmatprep.mubr.bf16.mxu0 0
        %2064 = vmatmul.mubr.bf16.gmra.mrb[0].mxu0 %v1160
        %v2065 = vpop.f32.mrb[0].mxu0
        %v2066 = vadd.f32 0.0, %v2065
        %v2067 = vpop.f32.mrb[0].mxu0
        %v2068 = vpop.f32.mrb[0].mxu0
        %v2069 = vadd.f32 0.0, %v2068
        %v2070 = vpop.f32.mrb[0].mxu0
        %2071 = vmatprep.mubr.bf16.mxu0 0
        %2072 = vmatmul.mubr.bf16.gmra.mrb[0].mxu0 %v2007
        %v2073 = vpop.f32.mrb[0].mxu0
        %v2074 = vadd.f32 0.0, %v2073
        %v2075 = vpop.f32.mrb[0].mxu0
        %v2076 = vpop.f32.mrb[0].mxu0
        %v2077 = vadd.f32 0.0, %v2076
        %v2078 = vpop.f32.mrb[0].mxu0
        %2079 = vmatprep.mubr.bf16.mxu0 0
        %2080 = vmatmul.mubr.bf16.gmra.mrb[0].mxu0 %v1166
        %v2081 = vpop.f32.mrb[0].mxu0
        %v2082 = vadd.f32 0.0, %v2081
        %v2083 = vpop.f32.mrb[0].mxu0
        %v2084 = vpop.f32.mrb[0].mxu0
        %v2085 = vadd.f32 0.0, %v2084
        %v2086 = vpop.f32.mrb[0].mxu0
        %2087 = vmatprep.mubr.bf16.mxu0 0
        %2088 = vmatmul.mubr.bf16.gmra.mrb[0].mxu0 %v1169
        %v2089 = vpop.f32.mrb[0].mxu0
        %v2090 = vadd.f32 0.0, %v2089
        %v2091 = vpop.f32.mrb[0].mxu0
        %v2092 = vpop.f32.mrb[0].mxu0
        %v2093 = vadd.f32 0.0, %v2092
        %v2094 = vpop.f32.mrb[0].mxu0
        %2095 = vmatprep.mubr.bf16.mxu0 0
        %2096 = vmatmul.mubr.bf16.gmra.mrb[0].mxu0 %v1172
        %v2097 = vpop.f32.mrb[0].mxu0
        %v2098 = vadd.f32 0.0, %v2097
        %v2099 = vpop.f32.mrb[0].mxu0
        %v2100 = vpop.f32.mrb[0].mxu0
        %v2101 = vadd.f32 0.0, %v2100
        %v2102 = vpop.f32.mrb[0].mxu0
        %2103 = vmatprep.mubr.bf16.mxu0 0
        %2104 = vmatmul.mubr.bf16.gmra.mrb[0].mxu0 %v2010
        %v2105 = vpop.f32.mrb[0].mxu0
        %v2106 = vadd.f32 0.0, %v2105
        %v2107 = vpop.f32.mrb[0].mxu0
        %v2108 = vpop.f32.mrb[0].mxu0
        %v2109 = vadd.f32 0.0, %v2108
        %v2110 = vpop.f32.mrb[0].mxu0
        %2111 = vdwg.mxu0
        %v2112 = vadd.f32 %v1986, %v2050
        %v2113 = vadd.f32 %v1987, %v2053
        %v2114 = vadd.f32 %v1988, %v2058
        %v2115 = vadd.f32 %v1989, %v2061
        %v2116 = vadd.f32 %v1990, %v2066
        %v2117 = vadd.f32 %v1991, %v2069
        %v2118 = vadd.f32 %v1992, %v2074
        %v2119 = vadd.f32 %v1993, %v2077
        %v2120 = vadd.f32 %v1994, %v2082
        %v2121 = vadd.f32 %v1995, %v2085
        %v2122 = vadd.f32 %v1996, %v2090
        %v2123 = vadd.f32 %v1997, %v2093
        %v2124 = vadd.f32 %v1998, %v2098
        %v2125 = vadd.f32 %v1999, %v2101
        %v2126 = vadd.f32 %v2000, %v2106
        %v2127 = vadd.f32 %v2001, %v2109
        %s2128 = scalar_lea.vmem %s2, 14
        %v2129 = vld [vmem:[%s2128] sm:$0x3]
        %v2130 = vpack.c.b16 %v993, %v1692
        %v2131 = vpack.c.b16 %v993, %v1693
        %v2133 = vsel %vm1016, %v2130, 0
        %v2136 = vsel %vm1016, %v2131, 0
        %v2139 = vsel %vm1041, %v2129, 0
        %2141 = vmatprep.subr.bf16.mxu0 0
        %2142 = vmatpush1.bf16.msra.mxu0 %v2139
        %2143 = vmatprep.subr.bf16.mxu0 0
        %2144 = vmatpush1.bf16.msra.mxu0 0
        %2145 = vmatprep.subr.bf16.mxu0 0
        %2146 = vmatpush1.bf16.msra.mxu0 0
        %2147 = vmatprep.subr.bf16.mxu0 0
        %2148 = vmatpush1.bf16.msra.mxu0 0
        %2149 = vmatprep.subr.bf16.mxu0 0
        %2150 = vmatpush1.bf16.msra.mxu0 0
        %2151 = vmatprep.subr.bf16.mxu0 0
        %2152 = vmatpush1.bf16.msra.mxu0 0
        %2153 = vmatprep.subr.bf16.mxu0 0
        %2154 = vmatpush1.bf16.msra.mxu0 0
        %2155 = vmatprep.subr.bf16.mxu0 0
        %2156 = vmatpush1.bf16.msra.mxu0 0
        %2157 = vmatprep.subr.bf16.mxu0 0
        %2158 = vmatpush1.bf16.msra.mxu0 0
        %2159 = vmatprep.subr.bf16.mxu0 0
        %2160 = vmatpush1.bf16.msra.mxu0 0
        %2161 = vmatprep.subr.bf16.mxu0 0
        %2162 = vmatpush1.bf16.msra.mxu0 0
        %2163 = vmatprep.subr.bf16.mxu0 0
        %2164 = vmatpush1.bf16.msra.mxu0 0
        %2165 = vmatprep.subr.bf16.mxu0 0
        %2166 = vmatpush1.bf16.msra.mxu0 0
        %2167 = vmatprep.subr.bf16.mxu0 0
        %2168 = vmatpush1.bf16.msra.mxu0 0
        %2169 = vmatprep.subr.bf16.mxu0 0
        %2170 = vmatpush1.bf16.msra.mxu0 0
        %2171 = vmatprep.subr.bf16.mxu0 0
        %2172 = vmatpush1.bf16.msra.mxu0 0
        %2173 = vmatprep.mubr.bf16.mxu0 0
        %2174 = vmatmul.mubr.bf16.gmra.mrb[0].mxu0 %v1021
        %v2175 = vpop.f32.mrb[0].mxu0
        %v2176 = vadd.f32 0.0, %v2175
        %v2177 = vpop.f32.mrb[0].mxu0
        %v2178 = vpop.f32.mrb[0].mxu0
        %v2179 = vadd.f32 0.0, %v2178
        %v2180 = vpop.f32.mrb[0].mxu0
        %2181 = vmatprep.mubr.bf16.mxu0 0
        %2182 = vmatmul.mubr.bf16.gmra.mrb[0].mxu0 %v1024
        %v2183 = vpop.f32.mrb[0].mxu0
        %v2184 = vadd.f32 0.0, %v2183
        %v2185 = vpop.f32.mrb[0].mxu0
        %v2186 = vpop.f32.mrb[0].mxu0
        %v2187 = vadd.f32 0.0, %v2186
        %v2188 = vpop.f32.mrb[0].mxu0
        %2189 = vmatprep.mubr.bf16.mxu0 0
        %2190 = vmatmul.mubr.bf16.gmra.mrb[0].mxu0 %v1027
        %v2191 = vpop.f32.mrb[0].mxu0
        %v2192 = vadd.f32 0.0, %v2191
        %v2193 = vpop.f32.mrb[0].mxu0
        %v2194 = vpop.f32.mrb[0].mxu0
        %v2195 = vadd.f32 0.0, %v2194
        %v2196 = vpop.f32.mrb[0].mxu0
        %2197 = vmatprep.mubr.bf16.mxu0 0
        %2198 = vmatmul.mubr.bf16.gmra.mrb[0].mxu0 %v2133
        %v2199 = vpop.f32.mrb[0].mxu0
        %v2200 = vadd.f32 0.0, %v2199
        %v2201 = vpop.f32.mrb[0].mxu0
        %v2202 = vpop.f32.mrb[0].mxu0
        %v2203 = vadd.f32 0.0, %v2202
        %v2204 = vpop.f32.mrb[0].mxu0
        %2205 = vmatprep.mubr.bf16.mxu0 0
        %2206 = vmatmul.mubr.bf16.gmra.mrb[0].mxu0 %v1033
        %v2207 = vpop.f32.mrb[0].mxu0
        %v2208 = vadd.f32 0.0, %v2207
        %v2209 = vpop.f32.mrb[0].mxu0
        %v2210 = vpop.f32.mrb[0].mxu0
        %v2211 = vadd.f32 0.0, %v2210
        %v2212 = vpop.f32.mrb[0].mxu0
        %2213 = vmatprep.mubr.bf16.mxu0 0
        %2214 = vmatmul.mubr.bf16.gmra.mrb[0].mxu0 %v1036
        %v2215 = vpop.f32.mrb[0].mxu0
        %v2216 = vadd.f32 0.0, %v2215
        %v2217 = vpop.f32.mrb[0].mxu0
        %v2218 = vpop.f32.mrb[0].mxu0
        %v2219 = vadd.f32 0.0, %v2218
        %v2220 = vpop.f32.mrb[0].mxu0
        %2221 = vmatprep.mubr.bf16.mxu0 0
        %2222 = vmatmul.mubr.bf16.gmra.mrb[0].mxu0 %v1039
        %v2223 = vpop.f32.mrb[0].mxu0
        %v2224 = vadd.f32 0.0, %v2223
        %v2225 = vpop.f32.mrb[0].mxu0
        %v2226 = vpop.f32.mrb[0].mxu0
        %v2227 = vadd.f32 0.0, %v2226
        %v2228 = vpop.f32.mrb[0].mxu0
        %2229 = vmatprep.mubr.bf16.mxu0 0
        %2230 = vmatmul.mubr.bf16.gmra.mrb[0].mxu0 %v2136
        %v2231 = vpop.f32.mrb[0].mxu0
        %v2232 = vadd.f32 0.0, %v2231
        %v2233 = vpop.f32.mrb[0].mxu0
        %v2234 = vpop.f32.mrb[0].mxu0
        %v2235 = vadd.f32 0.0, %v2234
        %v2236 = vpop.f32.mrb[0].mxu0
        %2237 = vdwg.mxu0
        %v2238 = vadd.f32 %v2112, %v2176
        %v2239 = vadd.f32 %v2113, %v2179
        %v2240 = vadd.f32 %v2114, %v2184
        %v2241 = vadd.f32 %v2115, %v2187
        %v2242 = vadd.f32 %v2116, %v2192
        %v2243 = vadd.f32 %v2117, %v2195
        %v2244 = vadd.f32 %v2118, %v2200
        %v2245 = vadd.f32 %v2119, %v2203
        %v2246 = vadd.f32 %v2120, %v2208
        %v2247 = vadd.f32 %v2121, %v2211
        %v2248 = vadd.f32 %v2122, %v2216
        %v2249 = vadd.f32 %v2123, %v2219
        %v2250 = vadd.f32 %v2124, %v2224
        %v2251 = vadd.f32 %v2125, %v2227
        %v2252 = vadd.f32 %v2126, %v2232
        %v2253 = vadd.f32 %v2127, %v2235
        %s2254 = scalar_lea.vmem %s2, 16
        %v2255 = vld [vmem:[%s2254] sm:$0x3]
        %v2256 = vpack.c.b16 %v1339, %v1852
        %v2257 = vpack.c.b16 %v1339, %v1853
        %v2259 = vsel %vm1016, %v2256, 0
        %v2262 = vsel %vm1016, %v2257, 0
        %v2265 = vsel %vm1041, %v2255, 0
        %2267 = vmatprep.subr.bf16.mxu0 0
        %2268 = vmatpush1.bf16.msra.mxu0 %v2265
        %2269 = vmatprep.subr.bf16.mxu0 0
        %2270 = vmatpush1.bf16.msra.mxu0 0
        %2271 = vmatprep.subr.bf16.mxu0 0
        %2272 = vmatpush1.bf16.msra.mxu0 0
        %2273 = vmatprep.subr.bf16.mxu0 0
        %2274 = vmatpush1.bf16.msra.mxu0 0
        %2275 = vmatprep.subr.bf16.mxu0 0
        %2276 = vmatpush1.bf16.msra.mxu0 0
        %2277 = vmatprep.subr.bf16.mxu0 0
        %2278 = vmatpush1.bf16.msra.mxu0 0
        %2279 = vmatprep.subr.bf16.mxu0 0
        %2280 = vmatpush1.bf16.msra.mxu0 0
        %2281 = vmatprep.subr.bf16.mxu0 0
        %2282 = vmatpush1.bf16.msra.mxu0 0
        %2283 = vmatprep.subr.bf16.mxu0 0
        %2284 = vmatpush1.bf16.msra.mxu0 0
        %2285 = vmatprep.subr.bf16.mxu0 0
        %2286 = vmatpush1.bf16.msra.mxu0 0
        %2287 = vmatprep.subr.bf16.mxu0 0
        %2288 = vmatpush1.bf16.msra.mxu0 0
        %2289 = vmatprep.subr.bf16.mxu0 0
        %2290 = vmatpush1.bf16.msra.mxu0 0
        %2291 = vmatprep.subr.bf16.mxu0 0
        %2292 = vmatpush1.bf16.msra.mxu0 0
        %2293 = vmatprep.subr.bf16.mxu0 0
        %2294 = vmatpush1.bf16.msra.mxu0 0
        %2295 = vmatprep.subr.bf16.mxu0 0
        %2296 = vmatpush1.bf16.msra.mxu0 0
        %2297 = vmatprep.subr.bf16.mxu0 0
        %2298 = vmatpush1.bf16.msra.mxu0 0
        %2299 = vmatprep.mubr.bf16.mxu0 0
        %2300 = vmatmul.mubr.bf16.gmra.mrb[0].mxu0 %v1366
        %v2301 = vpop.f32.mrb[0].mxu0
        %v2302 = vadd.f32 0.0, %v2301
        %v2303 = vpop.f32.mrb[0].mxu0
        %v2304 = vpop.f32.mrb[0].mxu0
        %v2305 = vadd.f32 0.0, %v2304
        %v2306 = vpop.f32.mrb[0].mxu0
        %2307 = vmatprep.mubr.bf16.mxu0 0
        %2308 = vmatmul.mubr.bf16.gmra.mrb[0].mxu0 %v1369
        %v2309 = vpop.f32.mrb[0].mxu0
        %v2310 = vadd.f32 0.0, %v2309
        %v2311 = vpop.f32.mrb[0].mxu0
        %v2312 = vpop.f32.mrb[0].mxu0
        %v2313 = vadd.f32 0.0, %v2312
        %v2314 = vpop.f32.mrb[0].mxu0
        %2315 = vmatprep.mubr.bf16.mxu0 0
        %2316 = vmatmul.mubr.bf16.gmra.mrb[0].mxu0 %v1372
        %v2317 = vpop.f32.mrb[0].mxu0
        %v2318 = vadd.f32 0.0, %v2317
        %v2319 = vpop.f32.mrb[0].mxu0
        %v2320 = vpop.f32.mrb[0].mxu0
        %v2321 = vadd.f32 0.0, %v2320
        %v2322 = vpop.f32.mrb[0].mxu0
        %2323 = vmatprep.mubr.bf16.mxu0 0
        %2324 = vmatmul.mubr.bf16.gmra.mrb[0].mxu0 %v2259
        %v2325 = vpop.f32.mrb[0].mxu0
        %v2326 = vadd.f32 0.0, %v2325
        %v2327 = vpop.f32.mrb[0].mxu0
        %v2328 = vpop.f32.mrb[0].mxu0
        %v2329 = vadd.f32 0.0, %v2328
        %v2330 = vpop.f32.mrb[0].mxu0
        %2331 = vmatprep.mubr.bf16.mxu0 0
        %2332 = vmatmul.mubr.bf16.gmra.mrb[0].mxu0 %v1378
        %v2333 = vpop.f32.mrb[0].mxu0
        %v2334 = vadd.f32 0.0, %v2333
        %v2335 = vpop.f32.mrb[0].mxu0
        %v2336 = vpop.f32.mrb[0].mxu0
        %v2337 = vadd.f32 0.0, %v2336
        %v2338 = vpop.f32.mrb[0].mxu0
        %2339 = vmatprep.mubr.bf16.mxu0 0
        %2340 = vmatmul.mubr.bf16.gmra.mrb[0].mxu0 %v1381
        %v2341 = vpop.f32.mrb[0].mxu0
        %v2342 = vadd.f32 0.0, %v2341
        %v2343 = vpop.f32.mrb[0].mxu0
        %v2344 = vpop.f32.mrb[0].mxu0
        %v2345 = vadd.f32 0.0, %v2344
        %v2346 = vpop.f32.mrb[0].mxu0
        %2347 = vmatprep.mubr.bf16.mxu0 0
        %2348 = vmatmul.mubr.bf16.gmra.mrb[0].mxu0 %v1384
        %v2349 = vpop.f32.mrb[0].mxu0
        %v2350 = vadd.f32 0.0, %v2349
        %v2351 = vpop.f32.mrb[0].mxu0
        %v2352 = vpop.f32.mrb[0].mxu0
        %v2353 = vadd.f32 0.0, %v2352
        %v2354 = vpop.f32.mrb[0].mxu0
        %2355 = vmatprep.mubr.bf16.mxu0 0
        %2356 = vmatmul.mubr.bf16.gmra.mrb[0].mxu0 %v2262
        %v2357 = vpop.f32.mrb[0].mxu0
        %v2358 = vadd.f32 0.0, %v2357
        %v2359 = vpop.f32.mrb[0].mxu0
        %v2360 = vpop.f32.mrb[0].mxu0
        %v2361 = vadd.f32 0.0, %v2360
        %v2362 = vpop.f32.mrb[0].mxu0
        %2363 = vdwg.mxu0
        %v2364 = vadd.f32 %v2238, %v2302
        %v2365 = vadd.f32 %v2239, %v2305
        %v2366 = vadd.f32 %v2240, %v2310
        %v2367 = vadd.f32 %v2241, %v2313
        %v2368 = vadd.f32 %v2242, %v2318
        %v2369 = vadd.f32 %v2243, %v2321
        %v2370 = vadd.f32 %v2244, %v2326
        %v2371 = vadd.f32 %v2245, %v2329
        %v2372 = vadd.f32 %v2246, %v2334
        %v2373 = vadd.f32 %v2247, %v2337
        %v2374 = vadd.f32 %v2248, %v2342
        %v2375 = vadd.f32 %v2249, %v2345
        %v2376 = vadd.f32 %v2250, %v2350
        %v2377 = vadd.f32 %v2251, %v2353
        %v2378 = vadd.f32 %v2252, %v2358
        %v2379 = vadd.f32 %v2253, %v2361
        %v2380 = vld [vmem:[%s5] sm:$0x1]
        %v2382 = vlaneseq
        %v2383 = vshrl.u32 %v2382, 7
        %v2384 = vsub.s32 0, %v2383
        %v2385 = vrot.slane %v2380, %v2384
        %v2387 = vadd.f32 %v2364, %v2385
        %v2388 = vadd.f32 %v2365, %v2385
        %v2389 = vadd.f32 %v2366, %v2385
        %v2390 = vadd.f32 %v2367, %v2385
        %v2391 = vadd.f32 %v2368, %v2385
        %v2392 = vadd.f32 %v2369, %v2385
        %v2393 = vadd.f32 %v2370, %v2385
        %v2394 = vadd.f32 %v2371, %v2385
        %v2395 = vadd.f32 %v2372, %v2385
        %v2396 = vadd.f32 %v2373, %v2385
        %v2397 = vadd.f32 %v2374, %v2385
        %v2398 = vadd.f32 %v2375, %v2385
        %v2399 = vadd.f32 %v2376, %v2385
        %v2400 = vadd.f32 %v2377, %v2385
        %v2401 = vadd.f32 %v2378, %v2385
        %v2402 = vadd.f32 %v2379, %v2385
        %v2403 = vmax.f32 %v2387, 0.0
        %v2404 = vmax.f32 %v2388, 0.0
        %v2405 = vmax.f32 %v2389, 0.0
        %v2406 = vmax.f32 %v2390, 0.0
        %v2407 = vmax.f32 %v2391, 0.0
        %v2408 = vmax.f32 %v2392, 0.0
        %v2409 = vmax.f32 %v2393, 0.0
        %v2410 = vmax.f32 %v2394, 0.0
        %v2411 = vmax.f32 %v2395, 0.0
        %v2412 = vmax.f32 %v2396, 0.0
        %v2413 = vmax.f32 %v2397, 0.0
        %v2414 = vmax.f32 %v2398, 0.0
        %v2415 = vmax.f32 %v2399, 0.0
        %v2416 = vmax.f32 %v2400, 0.0
        %v2417 = vmax.f32 %v2401, 0.0
        %v2418 = vmax.f32 %v2402, 0.0
        %v2419 = vpack.c.bf16 %v2404, %v2403
        %v2420 = vpack.c.bf16 %v2406, %v2405
        %v2421 = vpack.c.bf16 %v2408, %v2407
        %v2422 = vpack.c.bf16 %v2410, %v2409
        %v2423 = vpack.c.bf16 %v2412, %v2411
        %v2424 = vpack.c.bf16 %v2414, %v2413
        %v2425 = vpack.c.bf16 %v2416, %v2415
        %v2426 = vpack.c.bf16 %v2418, %v2417
        %v2427 = vld [vmem:[%s3] sm:$0x3]
        %v2428 = vld [vmem:[%s6] sm:$0x1]
        %v2430 = vlaneseq
        %v2431 = vshrl.u32 %v2430, 7
        %v2432 = vsub.s32 0, %v2431
        %v2433 = vrot.slane %v2428, %v2432
        %v2436 = vsel %vm1016, %v2419, 0
        %v2439 = vsel %vm1016, %v2420, 0
        %v2442 = vsel %vm1016, %v2421, 0
        %v2445 = vsel %vm1016, %v2422, 0
        %v2448 = vsel %vm1016, %v2423, 0
        %v2451 = vsel %vm1016, %v2424, 0
        %v2454 = vsel %vm1016, %v2425, 0
        %v2457 = vsel %vm1016, %v2426, 0
        %v2460 = vsel %vm1041, %v2427, 0
        %2462 = vmatprep.subr.bf16.mxu0 0
        %2463 = vmatpush1.bf16.msra.mxu0 %v2460
        %2464 = vmatprep.subr.bf16.mxu0 0
        %2465 = vmatpush1.bf16.msra.mxu0 0
        %2466 = vmatprep.subr.bf16.mxu0 0
        %2467 = vmatpush1.bf16.msra.mxu0 0
        %2468 = vmatprep.subr.bf16.mxu0 0
        %2469 = vmatpush1.bf16.msra.mxu0 0
        %2470 = vmatprep.subr.bf16.mxu0 0
        %2471 = vmatpush1.bf16.msra.mxu0 0
        %2472 = vmatprep.subr.bf16.mxu0 0
        %2473 = vmatpush1.bf16.msra.mxu0 0
        %2474 = vmatprep.subr.bf16.mxu0 0
        %2475 = vmatpush1.bf16.msra.mxu0 0
        %2476 = vmatprep.subr.bf16.mxu0 0
        %2477 = vmatpush1.bf16.msra.mxu0 0
        %2478 = vmatprep.subr.bf16.mxu0 0
        %2479 = vmatpush1.bf16.msra.mxu0 0
        %2480 = vmatprep.subr.bf16.mxu0 0
        %2481 = vmatpush1.bf16.msra.mxu0 0
        %2482 = vmatprep.subr.bf16.mxu0 0
        %2483 = vmatpush1.bf16.msra.mxu0 0
        %2484 = vmatprep.subr.bf16.mxu0 0
        %2485 = vmatpush1.bf16.msra.mxu0 0
        %2486 = vmatprep.subr.bf16.mxu0 0
        %2487 = vmatpush1.bf16.msra.mxu0 0
        %2488 = vmatprep.subr.bf16.mxu0 0
        %2489 = vmatpush1.bf16.msra.mxu0 0
        %2490 = vmatprep.subr.bf16.mxu0 0
        %2491 = vmatpush1.bf16.msra.mxu0 0
        %2492 = vmatprep.subr.bf16.mxu0 0
        %2493 = vmatpush1.bf16.msra.mxu0 0
        %2494 = vmatprep.mubr.bf16.mxu0 0
        %2495 = vmatmul.mubr.bf16.gmra.mrb[0].mxu0 %v2436
        %v2496 = vpop.f32.mrb[0].mxu0
        %v2497 = vadd.f32 %v2433, %v2496
        %v2498 = vpop.f32.mrb[0].mxu0
        %v2499 = vpop.f32.mrb[0].mxu0
        %v2500 = vadd.f32 %v2433, %v2499
        %v2501 = vpop.f32.mrb[0].mxu0
        %2502 = vmatprep.mubr.bf16.mxu0 0
        %2503 = vmatmul.mubr.bf16.gmra.mrb[0].mxu0 %v2439
        %v2504 = vpop.f32.mrb[0].mxu0
        %v2505 = vadd.f32 %v2433, %v2504
        %v2506 = vpop.f32.mrb[0].mxu0
        %v2507 = vpop.f32.mrb[0].mxu0
        %v2508 = vadd.f32 %v2433, %v2507
        %v2509 = vpop.f32.mrb[0].mxu0
        %2510 = vmatprep.mubr.bf16.mxu0 0
        %2511 = vmatmul.mubr.bf16.gmra.mrb[0].mxu0 %v2442
        %v2512 = vpop.f32.mrb[0].mxu0
        %v2513 = vadd.f32 %v2433, %v2512
        %v2514 = vpop.f32.mrb[0].mxu0
        %v2515 = vpop.f32.mrb[0].mxu0
        %v2516 = vadd.f32 %v2433, %v2515
        %v2517 = vpop.f32.mrb[0].mxu0
        %2518 = vmatprep.mubr.bf16.mxu0 0
        %2519 = vmatmul.mubr.bf16.gmra.mrb[0].mxu0 %v2445
        %v2520 = vpop.f32.mrb[0].mxu0
        %v2521 = vadd.f32 %v2433, %v2520
        %v2522 = vpop.f32.mrb[0].mxu0
        %v2523 = vpop.f32.mrb[0].mxu0
        %v2524 = vadd.f32 %v2433, %v2523
        %v2525 = vpop.f32.mrb[0].mxu0
        %2526 = vmatprep.mubr.bf16.mxu0 0
        %2527 = vmatmul.mubr.bf16.gmra.mrb[0].mxu0 %v2448
        %v2528 = vpop.f32.mrb[0].mxu0
        %v2529 = vadd.f32 %v2433, %v2528
        %v2530 = vpop.f32.mrb[0].mxu0
        %v2531 = vpop.f32.mrb[0].mxu0
        %v2532 = vadd.f32 %v2433, %v2531
        %v2533 = vpop.f32.mrb[0].mxu0
        %2534 = vmatprep.mubr.bf16.mxu0 0
        %2535 = vmatmul.mubr.bf16.gmra.mrb[0].mxu0 %v2451
        %v2536 = vpop.f32.mrb[0].mxu0
        %v2537 = vadd.f32 %v2433, %v2536
        %v2538 = vpop.f32.mrb[0].mxu0
        %v2539 = vpop.f32.mrb[0].mxu0
        %v2540 = vadd.f32 %v2433, %v2539
        %v2541 = vpop.f32.mrb[0].mxu0
        %2542 = vmatprep.mubr.bf16.mxu0 0
        %2543 = vmatmul.mubr.bf16.gmra.mrb[0].mxu0 %v2454
        %v2544 = vpop.f32.mrb[0].mxu0
        %v2545 = vadd.f32 %v2433, %v2544
        %v2546 = vpop.f32.mrb[0].mxu0
        %v2547 = vpop.f32.mrb[0].mxu0
        %v2548 = vadd.f32 %v2433, %v2547
        %v2549 = vpop.f32.mrb[0].mxu0
        %2550 = vmatprep.mubr.bf16.mxu0 0
        %2551 = vmatmul.mubr.bf16.gmra.mrb[0].mxu0 %v2457
        %v2552 = vpop.f32.mrb[0].mxu0
        %v2553 = vadd.f32 %v2433, %v2552
        %v2554 = vpop.f32.mrb[0].mxu0
        %v2555 = vpop.f32.mrb[0].mxu0
        %v2556 = vadd.f32 %v2433, %v2555
        %v2557 = vpop.f32.mrb[0].mxu0
        %2558 = vdwg.mxu0
        %v2559 = vadd.f32 %v2497, %v301
        %v2560 = vadd.f32 %v2500, %v302
        %v2561 = vadd.f32 %v2505, %v303
        %v2562 = vadd.f32 %v2508, %v304
        %v2563 = vadd.f32 %v2513, %v305
        %v2564 = vadd.f32 %v2516, %v306
        %v2565 = vadd.f32 %v2521, %v307
        %v2566 = vadd.f32 %v2524, %v308
        %v2567 = vadd.f32 %v2529, %v309
        %v2568 = vadd.f32 %v2532, %v310
        %v2569 = vadd.f32 %v2537, %v311
        %v2570 = vadd.f32 %v2540, %v312
        %v2571 = vadd.f32 %v2545, %v313
        %v2572 = vadd.f32 %v2548, %v314
        %v2573 = vadd.f32 %v2553, %v315
        %v2574 = vadd.f32 %v2556, %v316
        %v2575 = vmax.f32 %v2559, 0.0
        %v2576 = vmax.f32 %v2560, 0.0
        %v2577 = vmax.f32 %v2561, 0.0
        %v2578 = vmax.f32 %v2562, 0.0
        %v2579 = vmax.f32 %v2563, 0.0
        %v2580 = vmax.f32 %v2564, 0.0
        %v2581 = vmax.f32 %v2565, 0.0
        %v2582 = vmax.f32 %v2566, 0.0
        %v2583 = vmax.f32 %v2567, 0.0
        %v2584 = vmax.f32 %v2568, 0.0
        %v2585 = vmax.f32 %v2569, 0.0
        %v2586 = vmax.f32 %v2570, 0.0
        %v2587 = vmax.f32 %v2571, 0.0
        %v2588 = vmax.f32 %v2572, 0.0
        %v2589 = vmax.f32 %v2573, 0.0
        %v2590 = vmax.f32 %v2574, 0.0
        %2591 = vst.msk [vmem:[%s297] sm:$0xff] %vm340, %v2575
        %2592 = vst.msk [vmem:[%s297 + $0x8] sm:$0xff] %vm340, %v2576
        %2593 = vst.msk [vmem:[%s297 + $0x10] sm:$0xff] %vm340, %v2577
        %2594 = vst.msk [vmem:[%s297 + $0x18] sm:$0xff] %vm340, %v2578
        %2595 = vst.msk [vmem:[%s297 + $0x20] sm:$0xff] %vm340, %v2579
        %2596 = vst.msk [vmem:[%s297 + $0x28] sm:$0xff] %vm340, %v2580
        %2597 = vst.msk [vmem:[%s297 + $0x30] sm:$0xff] %vm340, %v2581
        %2598 = vst.msk [vmem:[%s297 + $0x38] sm:$0xff] %vm340, %v2582
        %2599 = vst.msk [vmem:[%s297 + $0x40] sm:$0xff] %vm340, %v2583
        %2600 = vst.msk [vmem:[%s297 + $0x48] sm:$0xff] %vm340, %v2584
        %2601 = vst.msk [vmem:[%s297 + $0x50] sm:$0xff] %vm340, %v2585
        %2602 = vst.msk [vmem:[%s297 + $0x58] sm:$0xff] %vm340, %v2586
        %2603 = vst.msk [vmem:[%s297 + $0x60] sm:$0xff] %vm340, %v2587
        %2604 = vst.msk [vmem:[%s297 + $0x68] sm:$0xff] %vm340, %v2588
        %2605 = vst.msk [vmem:[%s297 + $0x70] sm:$0xff] %vm340, %v2589
        %2606 = vst.msk [vmem:[%s297 + $0x78] sm:$0xff] %vm340, %v2590
        %s2607 = sand.u32 %s184, 1
        %s2608 = scalar_lea.sflag [#allocation4], %s2607
        %s2609 = sand.u32 %s184, 1
        %s2610 = smul.addr %s2609, 128
        %s2611 = scalar_lea.vmem [#allocation5], %s2610
        // Predicated region
        $region53: #{bottleneck_pallas_nchw.1} parent=47 // pred_check
          %p2612 = pneg %p194
        $region54: #{bottleneck_pallas_nchw.1} parent=47 // pred_check_branch
          %2614 = sbr.rel (%p2612) target = $region56
        $region55: #{bottleneck_pallas_nchw.1} parent=47 // pred_region
          %s2615 = smul.u32 2, %s24
          %s2617 = ssub.s32 2048, 2048
          %2618 = vsyncadd %s2608, %s2617
          %s2619 = smul.addr %s2615, 8
          %s2620 = smul.addr %s2619, 128
          %s2621 = scalar_lea.hbm %s7, %s2620
          %s2622 = sshll.u32 %s2611, 4
          %s2623 = int_to_ptr.vmem [resolvable:$true] %s2622
          %2628 = dma.vmem_to_hbm [thread:$0]  %s2623, 2048, %s2621, %s2608, 128, 128, 8
        $region56: #{bottleneck_pallas_nchw.1} parent=47 // pred_fallthru
          _
      $region48: #{bottleneck_pallas_nchw.1} parent=5 // pred_fallthru
        _
      %p2629 = scmp.le.s32.totalorder 2, %s19
      // Predicated region
      $region57: #{bottleneck_pallas_nchw.1} parent=5 // pred_check
        %p2630 = pneg %p2629
      $region58: #{bottleneck_pallas_nchw.1} parent=5 // pred_check_branch
        %2632 = sbr.rel (%p2630) target = $region60
      $region59: #{bottleneck_pallas_nchw.1} parent=5 // pred_region
        %s2633 = ssub.s32 %s19, 2
        // Predicated region
        $region61: #{bottleneck_pallas_nchw.1} parent=59 // pred_check
          %p2634 = pneg %p200
        $region62: #{bottleneck_pallas_nchw.1} parent=59 // pred_check_branch
          %2636 = sbr.rel (%p2634) target = $region64
        $region63: #{bottleneck_pallas_nchw.1} parent=59 // pred_region
          %s2637 = sand.u32 %s185, 1
          %s2638 = scalar_lea.sflag [#allocation4], %s2637
          %s2639 = sand.u32 %s185, 1
          %s2640 = smul.addr %s2639, 128
          %s2641 = scalar_lea.vmem [#allocation5], %s2640
          %2642 = dma.done %s2638, 2048
        $region64: #{bottleneck_pallas_nchw.1} parent=59 // pred_fallthru
          _
      $region60: #{bottleneck_pallas_nchw.1} parent=5 // pred_fallthru
        _
    $region6: #{bottleneck_pallas_nchw.1} parent=1 // loop_footer
      %s23 = sadd.s32 1, %s19
    $region7: #{bottleneck_pallas_nchw.1} parent=1 // loop_footer_branch
      %18 = sbr.rel target = $region3
    $region8: #{bottleneck_pallas_nchw.1} parent=1 // loop_exit
      _
    %2643 = vsyncpa [#allocation3], 1
    %s2644 = scalar_lea.sflag [#allocation3], 1
    %2645 = vsyncpa %s2644, 1
    %2646 = vsyncpa [#allocation4], 1
    %s2647 = scalar_lea.sflag [#allocation4], 1
    %2648 = vsyncpa %s2647, 1

</llo_original>
